<compile_context>
chip_gen: v7x
topology: tpu7x:2x2x1
jax: 0.10.0
libtpu: 0.0.40
codegen_flags: <defaults>
</compile_context>

<pallas_src>
import functools

import jax
import jax.numpy as jnp
from jax.experimental import pallas as pl
from jax.experimental.pallas import tpu as pltpu

MODALS = 3            # RGB / NI / TI
C_IN = 3              # input channels per modality
C_MID = 64            # trunk channels (logical)
C_PAD = 128           # trunk channels padded to lane width
K_RAW = 9 * C_IN      # 27 (3x3 patch * C_IN)
K_PAD = 32            # im2col contraction dim padded
FEAT = 512            # fc512 feature dim (matches resnet50_fc512 output)
NC_PAD = 128          # classifier output padded to lane width


# ---------------------------------------------------------------------------
# Per-generation budgets (review items 4/5)
# ---------------------------------------------------------------------------
def _vmem_capacity_bytes(default=64 << 20):
    try:
        info = pltpu.get_tpu_info()
    except Exception:
        return default
    for attr in ("vmem_capacity_bytes", "vmem_size_bytes", "vmem_bytes"):
        v = getattr(info, attr, None)
        if v is None:
            continue
        try:
            v = int(v)
        except (TypeError, ValueError):
            continue
        if v > 0:
            return v
    return default


def _tpu_budget():
    """(max conv M-tile rows, scoped vmem limit) chosen per TPU generation."""
    vmem = _vmem_capacity_bytes()
    if vmem >= (96 << 20):          # v5e / v6e class: 128 MiB VMEM per core
        return 8192, 64 << 20
    return 2048, 32 << 20           # v7x class: 64 MiB physical VMEM per core


def _pick_conv_tiling(n_imgs, hw, max_rows):
    """Return (images_per_tile, rows_per_tile) with images_per_tile*rows bounded."""
    if hw <= max_rows:
        ipt = 1
        for cand in range(1, n_imgs + 1):
            if n_imgs % cand == 0 and cand * hw <= max_rows:
                ipt = cand
        return ipt, hw
    # Row-tile inside a single image; keep the tile a multiple of 8 rows so the
    # (tr, K_PAD) input block satisfies the (8, 128) constraint.
    tr = None
    for cand in range(8, max_rows + 1, 8):
        if hw % cand == 0:
            tr = cand
    if tr is None:
        tr = 1
        for cand in range(1, max_rows + 1):
            if hw % cand == 0:
                tr = cand
    return 1, tr


def _pick_batch_tile(n, cap=1024):
    if n <= cap:
        return n
    bt = None
    for cand in range(8, cap + 1, 8):
        if n % cand == 0:
            bt = cand
    return bt if bt is not None else n


# ---------------------------------------------------------------------------
# Kernel 1: conv(im2col matmul) + folded-BN shift + ReLU + global avg pool
# ---------------------------------------------------------------------------
def _conv_bn_relu_gap_kernel(cols_ref, w_ref, shift_ref, pooled_ref, acc_ref,
                             *, ipt, tr, hw, single_img_tile):
    # cols_ref:  (ipt, tr, K_PAD)   bf16
    # w_ref:     (K_PAD, C_PAD)     bf16 (BN scale folded in)
    # shift_ref: (1, C_PAD)         f32
    # pooled_ref:(n_imgs, C_PAD)    bf16 (resident full block)
    # acc_ref:   (ipt, C_PAD)       f32 scratch (GAP accumulator)
    r = pl.program_id(2)

    x = cols_ref[...].reshape(ipt * tr, K_PAD)
    y = jnp.dot(x, w_ref[...], preferred_element_type=jnp.float32)
    y = jnp.maximum(y + shift_ref[...], 0.0)                  # f32 epilogue
    if ipt == 1:
        part = jnp.sum(y, axis=0, keepdims=True)              # (1, C_PAD)
    else:
        part = jnp.sum(y.reshape(ipt, tr, C_PAD), axis=1)     # (ipt, C_PAD)

    @pl.when(r == 0)
    def _():
        acc_ref[...] = part

    @pl.when(r > 0)
    def _():
        acc_ref[...] = acc_ref[...] + part

    @pl.when(r == pl.num_programs(2) - 1)
    def _():
        pooled = (acc_ref[...] * (1.0 / hw)).astype(pooled_ref.dtype)
        if single_img_tile:
            pooled_ref[...] = pooled
        else:
            start = pl.multiple_of(pl.program_id(1) * ipt, ipt)
            pooled_ref[pl.ds(start, ipt), :] = pooled


def conv_bn_relu_gap(cols, conv_w, conv_shift, *, n_imgs, hw, max_rows, vmem_limit):
    """cols: (MODALS, n_imgs, hw, K_PAD) bf16 -> pooled (MODALS, n_imgs, C_PAD) bf16."""
    ipt, tr = _pick_conv_tiling(n_imgs, hw, max_rows)
    n_img_tiles = n_imgs // ipt
    n_row_tiles = hw // tr
    kern = functools.partial(_conv_bn_relu_gap_kernel, ipt=ipt, tr=tr, hw=hw,
                             single_img_tile=(n_img_tiles == 1))
    return pl.pallas_call(
        kern,
        out_shape=jax.ShapeDtypeStruct((MODALS, n_imgs, C_PAD), jnp.bfloat16),
        grid=(MODALS, n_img_tiles, n_row_tiles),
        in_specs=[
            pl.BlockSpec((None, ipt, tr, K_PAD), lambda m, i, r: (m, i, r, 0)),
            pl.BlockSpec((None, K_PAD, C_PAD), lambda m, i, r: (m, 0, 0)),
            pl.BlockSpec((None, 1, C_PAD), lambda m, i, r: (m, 0, 0)),
        ],
        # Full (n_imgs, C_PAD) block kept resident per modality: always a legal
        # block shape and written row-dense once per image tile.
        out_specs=pl.BlockSpec((None, n_imgs, C_PAD), lambda m, i, r: (m, 0, 0)),
        scratch_shapes=[pltpu.VMEM((ipt, C_PAD), jnp.float32)],
        compiler_params=pltpu.CompilerParams(
            dimension_semantics=("parallel", "arbitrary", "arbitrary"),
            vmem_limit_bytes=vmem_limit),
    )(cols, conv_w, conv_shift)


# ---------------------------------------------------------------------------
# Kernel 2: fc512 + folded-BN shift + ReLU + fused classifier heads
# ---------------------------------------------------------------------------
def _tail_kernel(pooled_ref, fcw_ref, fcs_ref, headw_ref, clsb_ref, clab_ref,
                 feat_ref, lm_ref, la_ref):
    m = pl.program_id(1)

    feat = jnp.dot(pooled_ref[...], fcw_ref[...],
                   preferred_element_type=jnp.float32)        # (BT, FEAT) f32
    feat = jnp.maximum(feat + fcs_ref[...], 0.0)
    feat_ref[...] = feat.astype(feat_ref.dtype)               # bf16 writeback

    # One 256-wide matmul covers [per-modality head | modality slice of "all"].
    heads = jnp.dot(feat.astype(jnp.bfloat16), headw_ref[...],
                    preferred_element_type=jnp.float32)       # (BT, 2*NC_PAD)
    lm_ref[...] = heads[:, :NC_PAD] + clsb_ref[...]
    part = heads[:, NC_PAD:]

    @pl.when(m == 0)
    def _():
        la_ref[...] = clab_ref[...] + part                    # init + bias once

    @pl.when(m > 0)
    def _():
        la_ref[...] = la_ref[...] + part                      # accumulate over modalities


def fc_and_classify(pooled, fc_w, fc_shift, head_w, cls_b, cls_all_b, *, n, vmem_limit):
    bt = _pick_batch_tile(n)
    out_shapes = (
        jax.ShapeDtypeStruct((MODALS, n, FEAT), jnp.bfloat16),    # per-modality feats
        jax.ShapeDtypeStruct((MODALS, n, NC_PAD), jnp.float32),   # per-modality logits
        jax.ShapeDtypeStruct((n, NC_PAD), jnp.float32),           # cls_all logits
    )
    return pl.pallas_call(
        _tail_kernel,
        out_shape=out_shapes,
        grid=(n // bt, MODALS),
        in_specs=[
            pl.BlockSpec((None, bt, C_PAD), lambda t, m: (m, t, 0)),
            pl.BlockSpec((None, C_PAD, FEAT), lambda t, m: (m, 0, 0)),
            pl.BlockSpec((None, 1, FEAT), lambda t, m: (m, 0, 0)),
            pl.BlockSpec((None, FEAT, 2 * NC_PAD), lambda t, m: (m, 0, 0)),
            pl.BlockSpec((None, 1, NC_PAD), lambda t, m: (m, 0, 0)),
            pl.BlockSpec((1, NC_PAD), lambda t, m: (0, 0)),
        ],
        out_specs=(
            pl.BlockSpec((None, bt, FEAT), lambda t, m: (m, t, 0)),
            pl.BlockSpec((None, bt, NC_PAD), lambda t, m: (m, t, 0)),
            pl.BlockSpec((bt, NC_PAD), lambda t, m: (t, 0)),      # resident accumulator
        ),
        compiler_params=pltpu.CompilerParams(
            dimension_semantics=("parallel", "arbitrary"),
            vmem_limit_bytes=vmem_limit),
    )(pooled, fc_w, fc_shift, head_w, cls_b, cls_all_b)


# ---------------------------------------------------------------------------
# Plain-JAX glue
# ---------------------------------------------------------------------------
def build_patches(x):
    """x: (MODALS, N, C, H, W) f32 -> (MODALS, N, H*W, K_PAD) bf16 patches.

    Single fused bf16 producer: cast first, then pad + 9 shifted slices + the
    27->32 zero pad through ONE concatenate, so XLA writes the bf16 patch array
    in a single pass over the inflated data.
    """
    m, n, c, h, w = x.shape
    xb = jnp.transpose(x.astype(jnp.bfloat16), (0, 1, 3, 4, 2))       # (M,N,H,W,C)
    xp = jnp.pad(xb, ((0, 0), (0, 0), (1, 1), (1, 1), (0, 0)))
    pieces = [xp[:, :, dy:dy + h, dx:dx + w, :]
              for dy in range(3) for dx in range(3)]
    pieces.append(jnp.zeros((m, n, h, w, K_PAD - 9 * c), jnp.bfloat16))
    cols = jnp.concatenate(pieces, axis=-1)                            # (M,N,H,W,32)
    return cols.reshape(m, n, h * w, K_PAD)


def bn_fold(gamma, beta, mean, var, eps=1e-5):
    scale = gamma / jnp.sqrt(var + eps)
    shift = beta - mean * scale
    return scale, shift


# ---------------------------------------------------------------------------
# Parameter init (deterministic, synthetic) and prep (fold BN, pad, pack, cast)
# ---------------------------------------------------------------------------
def init_backbone(key):
    k = jax.random.split(key, 6)
    return {
        "conv_w": jax.random.normal(k[0], (K_RAW, C_MID), jnp.float32) * 0.05,
        "bn1_gamma": jnp.ones((C_MID,), jnp.float32),
        "bn1_beta": jax.random.normal(k[1], (C_MID,), jnp.float32) * 0.01,
        "bn1_mean": jax.random.normal(k[2], (C_MID,), jnp.float32) * 0.01,
        "bn1_var": jnp.ones((C_MID,), jnp.float32),
        "fc_w": jax.random.normal(k[3], (C_MID, FEAT), jnp.float32) * 0.05,
        "bn2_gamma": jnp.ones((FEAT,), jnp.float32),
        "bn2_beta": jax.random.normal(k[4], (FEAT,), jnp.float32) * 0.01,
        "bn2_mean": jax.random.normal(k[5], (FEAT,), jnp.float32) * 0.01,
        "bn2_var": jnp.ones((FEAT,), jnp.float32),
    }


def init_model(key, num_classes):
    ks = jax.random.split(key, MODALS + 8)
    params = {"backbones": [init_backbone(ks[m]) for m in range(MODALS)]}

    def lin(kw, kb, in_dim):
        return (jax.random.normal(kw, (in_dim, num_classes), jnp.float32) * 0.02,
                jax.random.normal(kb, (num_classes,), jnp.float32) * 0.01)

    params["cls_RGB_w"], params["cls_RGB_b"] = lin(ks[3], ks[4], FEAT)
    params["cls_NI_w"], params["cls_NI_b"] = lin(ks[5], ks[6], FEAT)
    params["cls_TI_w"], params["cls_TI_b"] = lin(ks[7], ks[8], FEAT)
    params["cls_all_w"], params["cls_all_b"] = lin(ks[9], ks[10], FEAT * MODALS)
    return params


def prepare_params(params):
    """Fold BN scales into weights, zero-pad to lane-dense shapes, fuse the two
    classifier heads into one 256-wide weight per modality, stack, cast to bf16."""
    conv_w, conv_shift, fc_w, fc_shift = [], [], [], []
    for bp in params["backbones"]:
        s1, b1 = bn_fold(bp["bn1_gamma"], bp["bn1_beta"], bp["bn1_mean"], bp["bn1_var"])
        w1 = bp["conv_w"] * s1[None, :]                                    # (27, 64)
        conv_w.append(jnp.pad(w1, ((0, K_PAD - K_RAW), (0, C_PAD - C_MID))))
        conv_shift.append(jnp.pad(b1, (0, C_PAD - C_MID)))
        s2, b2 = bn_fold(bp["bn2_gamma"], bp["bn2_beta"], bp["bn2_mean"], bp["bn2_var"])
        w2 = bp["fc_w"] * s2[None, :]                                      # (64, 512)
        fc_w.append(jnp.pad(w2, ((0, C_PAD - C_MID), (0, 0))))
        fc_shift.append(b2)

    nc = params["cls_RGB_w"].shape[1]
    claw = params["cls_all_w"].reshape(MODALS, FEAT, nc)    # rows match concat order
    head_w, cls_b = [], []
    for i, name in enumerate(("RGB", "NI", "TI")):          # matches x[0..2] order
        wm = jnp.pad(params[f"cls_{name}_w"], ((0, 0), (0, NC_PAD - nc)))
        wa = jnp.pad(claw[i], ((0, 0), (0, NC_PAD - nc)))
        head_w.append(jnp.concatenate([wm, wa], axis=1))                   # (512, 256)
        cls_b.append(jnp.pad(params[f"cls_{name}_b"], (0, NC_PAD - nc)))
    clab = jnp.pad(params["cls_all_b"], (0, NC_PAD - nc)).reshape(1, NC_PAD)

    return {
        "conv_w": jnp.stack(conv_w).astype(jnp.bfloat16),                # (3, 32, 128)
        "conv_shift": jnp.stack(conv_shift).reshape(MODALS, 1, C_PAD),   # (3, 1, 128) f32
        "fc_w": jnp.stack(fc_w).astype(jnp.bfloat16),                    # (3, 128, 512)
        "fc_shift": jnp.stack(fc_shift).reshape(MODALS, 1, FEAT),        # (3, 1, 512) f32
        "head_w": jnp.stack(head_w).astype(jnp.bfloat16),                # (3, 512, 256)
        "cls_b": jnp.stack(cls_b).reshape(MODALS, 1, NC_PAD),            # (3, 1, 128) f32
        "cls_all_b": clab,                                               # (1, 128) f32
    }


# ---------------------------------------------------------------------------
# Forward pass
# ---------------------------------------------------------------------------
def resnet3modal_forward(prep, x, *, num_classes, training=True):
    """x: (3, N, C, H, W) — one NCHW tensor per modality (matches PyTorch x[0..2])."""
    modals, n, c, h, w = x.shape
    hw = h * w
    max_rows, vmem_limit = _tpu_budget()

    cols = build_patches(x)                                            # (3, N, HW, 32) bf16

    # conv + BN + ReLU + GAP (one gridded kernel, all 3 modalities)
    pooled = conv_bn_relu_gap(cols, prep["conv_w"], prep["conv_shift"],
                              n_imgs=n, hw=hw, max_rows=max_rows,
                              vmem_limit=vmem_limit)                   # (3, N, 128) bf16

    # fc512 + BN + ReLU + fused classifier heads (batch-parallel x modality grid)
    feats, logits_m, logits_all = fc_and_classify(
        pooled, prep["fc_w"], prep["fc_shift"], prep["head_w"],
        prep["cls_b"], prep["cls_all_b"], n=n, vmem_limit=vmem_limit)

    if not training:
        fc_all = jnp.concatenate([feats[0], feats[1], feats[2]], axis=1)  # (N, 1536)
        return fc_all.astype(jnp.float32)
    # loss == 'softmax' branch: [RGB, NI, TI, all] logits (padding sliced off)
    return [logits_m[0][:, :num_classes],
            logits_m[1][:, :num_classes],
            logits_m[2][:, :num_classes],
            logits_all[:, :num_classes]]


# ---------------------------------------------------------------------------
# Pure-JAX reference (matching bf16-operand / f32-accumulate precision)
# ---------------------------------------------------------------------------
def reference_forward(prep, x, num_classes):
    hp = jax.lax.Precision.HIGHEST
    cols = build_patches(x).astype(jnp.float32)                          # (M,N,HW,32)
    w1 = prep["conv_w"].astype(jnp.float32)
    y = jnp.einsum("mnpk,mkc->mnpc", cols, w1, precision=hp) + prep["conv_shift"][:, None]
    y = jnp.maximum(y, 0.0)
    pooled = y.mean(axis=2).astype(jnp.bfloat16).astype(jnp.float32)     # (M,N,128)
    w2 = prep["fc_w"].astype(jnp.float32)
    feat = jnp.einsum("mnc,mcf->mnf", pooled, w2, precision=hp) + prep["fc_shift"]
    feat = jnp.maximum(feat, 0.0)
    featb = feat.astype(jnp.bfloat16).astype(jnp.float32)
    hwt = prep["head_w"].astype(jnp.float32)
    heads = jnp.einsum("mnf,mfo->mno", featb, hwt, precision=hp)
    lm = heads[..., :NC_PAD] + prep["cls_b"]
    la = jnp.sum(heads[..., NC_PAD:], axis=0) + prep["cls_all_b"]
    return [lm[0, :, :num_classes], lm[1, :, :num_classes],
            lm[2, :, :num_classes], la[:, :num_classes]]


# ---------------------------------------------------------------------------
if __name__ == "__main__":
    key = jax.random.PRNGKey(0)
    kx, kp = jax.random.split(key)

    num_classes = 16
    N, H, W = 2, 16, 16
    x = jax.random.normal(kx, (MODALS, N, C_IN, H, W), jnp.float32)

    params = init_model(kp, num_classes)
    prep = prepare_params(params)

    fwd_train = jax.jit(functools.partial(
        resnet3modal_forward, num_classes=num_classes, training=True))
    fwd_eval = jax.jit(functools.partial(
        resnet3modal_forward, num_classes=num_classes, training=False))

    # training / softmax branch: list of 4 logit tensors
    logits = fwd_train(prep, x)
    logits = [jax.block_until_ready(l) for l in logits]
    assert logits[0].shape == (N, num_classes)
    assert logits[3].shape == (N, num_classes)

    # eval branch: concatenated 1536-d features
    fc_all = jax.block_until_ready(fwd_eval(prep, x))
    assert fc_all.shape == (N, FEAT * MODALS)

    # correctness vs. pure-JAX reference at matching precision
    ref = reference_forward(prep, x, num_classes)
    for got, want in zip(logits, ref):
        assert jnp.allclose(got, want, atol=1e-2, rtol=1e-2), \
            float(jnp.max(jnp.abs(got - want)))

    print("KERNEL_OK")
</pallas_src>

<mosaic_0001>
module attributes {stable_mosaic.version = 11 : i64} {
  func.func @_conv_bn_relu_gap_kernel(%arg0: i32, %arg1: i32, %arg2: i32, %arg3: memref<1x2x256x32xbf16, #tpu.memory_space<vmem>>, %arg4: memref<1x32x128xbf16, #tpu.memory_space<vmem>>, %arg5: memref<1x1x128xf32, #tpu.memory_space<vmem>>, %arg6: memref<1x2x128xbf16, #tpu.memory_space<vmem>>, %arg7: memref<2x128xf32, #tpu.memory_space<vmem>>) attributes {dimension_semantics = [#tpu.dimension_semantics<parallel>, #tpu.dimension_semantics<arbitrary>, #tpu.dimension_semantics<arbitrary>], iteration_bounds = array<i64: 3, 1, 1>, scalar_prefetch = 0 : i64, scratch_operands = 1 : i64, tpu.core_type = #tpu.core_type<tc>, window_params = [{transform_indices = @transform_0, window_bounds = array<i64: 1, 2, 256, 32>}, {transform_indices = @transform_1, window_bounds = array<i64: 1, 32, 128>}, {transform_indices = @transform_2, window_bounds = array<i64: 1, 1, 128>}, {transform_indices = @transform_3, window_bounds = array<i64: 1, 2, 128>}]} {
    %c0 = arith.constant 0 : index
    %c0_0 = arith.constant 0 : index
    %c0_1 = arith.constant 0 : index
    %c0_2 = arith.constant 0 : index
    %0 = vector.load %arg3[%c0, %c0_0, %c0_1, %c0_2] : memref<1x2x256x32xbf16, #tpu.memory_space<vmem>>, vector<1x2x256x32xbf16>
    %1 = vector.shape_cast %0 : vector<1x2x256x32xbf16> to vector<2x256x32xbf16>
    %2 = vector.shape_cast %1 : vector<2x256x32xbf16> to vector<512x32xbf16>
    %c0_3 = arith.constant 0 : index
    %c0_4 = arith.constant 0 : index
    %c0_5 = arith.constant 0 : index
    %3 = vector.load %arg4[%c0_3, %c0_4, %c0_5] : memref<1x32x128xbf16, #tpu.memory_space<vmem>>, vector<1x32x128xbf16>
    %4 = vector.shape_cast %3 : vector<1x32x128xbf16> to vector<32x128xbf16>
    %cst = arith.constant dense<0.000000e+00> : vector<512x128xf32>
    %5 = tpu.matmul %2, %4, %cst {dimension_numbers = #tpu.dot_dimension_numbers<[1], [0], [0], [1], [0, 0, 1, 1], [], []>} : vector<512x32xbf16>, vector<32x128xbf16>, vector<512x128xf32> -> vector<512x128xf32>
    %c0_6 = arith.constant 0 : index
    %c0_7 = arith.constant 0 : index
    %c0_8 = arith.constant 0 : index
    %6 = vector.load %arg5[%c0_6, %c0_7, %c0_8] : memref<1x1x128xf32, #tpu.memory_space<vmem>>, vector<1x1x128xf32>
    %7 = vector.shape_cast %6 : vector<1x1x128xf32> to vector<1x128xf32>
    %8 = vector.broadcast %7 : vector<1x128xf32> to vector<512x128xf32>
    %9 = arith.addf %5, %8 : vector<512x128xf32>
    %cst_9 = arith.constant 0.000000e+00 : f32
    %10 = vector.broadcast %cst_9 : f32 to vector<512x128xf32>
    %11 = arith.maximumf %9, %10 : vector<512x128xf32>
    %12 = vector.shape_cast %11 : vector<512x128xf32> to vector<2x256x128xf32>
    %cst_10 = arith.constant dense<0.000000e+00> : vector<2x128xf32>
    %13 = vector.multi_reduction <add>, %12, %cst_10 [1] : vector<2x256x128xf32> to vector<2x128xf32>
    %c0_i32 = arith.constant 0 : i32
    %14 = arith.cmpi eq, %arg2, %c0_i32 : i32
    %15 = arith.extui %14 : i1 to i32
    %c0_i32_11 = arith.constant 0 : i32
    %16 = arith.cmpi ne, %15, %c0_i32_11 : i32
    scf.if %16 {
      %c0_16 = arith.constant 0 : index
      %c0_17 = arith.constant 0 : index
      %23 = vector.load %arg7[%c0_16, %c0_17] : memref<2x128xf32, #tpu.memory_space<vmem>>, vector<2x128xf32>
      tpu.vector_store %arg7[%c0_16, %c0_17], %13 {strides = array<i32>} : memref<2x128xf32, #tpu.memory_space<vmem>>, vector<2x128xf32>,
    } else {
    }
    %c0_i32_12 = arith.constant 0 : i32
    %17 = arith.cmpi sgt, %arg2, %c0_i32_12 : i32
    %18 = arith.extui %17 : i1 to i32
    %c0_i32_13 = arith.constant 0 : i32
    %19 = arith.cmpi ne, %18, %c0_i32_13 : i32
    scf.if %19 {
      %c0_16 = arith.constant 0 : index
      %c0_17 = arith.constant 0 : index
      %23 = vector.load %arg7[%c0_16, %c0_17] : memref<2x128xf32, #tpu.memory_space<vmem>>, vector<2x128xf32>
      %24 = arith.addf %23, %13 : vector<2x128xf32>
      %c0_18 = arith.constant 0 : index
      %c0_19 = arith.constant 0 : index
      %25 = vector.load %arg7[%c0_18, %c0_19] : memref<2x128xf32, #tpu.memory_space<vmem>>, vector<2x128xf32>
      tpu.vector_store %arg7[%c0_18, %c0_19], %24 {strides = array<i32>} : memref<2x128xf32, #tpu.memory_space<vmem>>, vector<2x128xf32>,
    } else {
    }
    %c0_i32_14 = arith.constant 0 : i32
    %20 = arith.cmpi eq, %arg2, %c0_i32_14 : i32
    %21 = arith.extui %20 : i1 to i32
    %c0_i32_15 = arith.constant 0 : i32
    %22 = arith.cmpi ne, %21, %c0_i32_15 : i32
    scf.if %22 {
      %c0_16 = arith.constant 0 : index
      %c0_17 = arith.constant 0 : index
      %23 = vector.load %arg7[%c0_16, %c0_17] : memref<2x128xf32, #tpu.memory_space<vmem>>, vector<2x128xf32>
      %cst_18 = arith.constant 3.906250e-03 : f32
      %24 = vector.broadcast %cst_18 : f32 to vector<2x128xf32>
      %25 = arith.mulf %23, %24 : vector<2x128xf32>
      %26 = arith.truncf %25 : vector<2x128xf32> to vector<2x128xbf16>
      %c0_19 = arith.constant 0 : index
      %c0_20 = arith.constant 0 : index
      %c0_21 = arith.constant 0 : index
      %27 = vector.load %arg6[%c0_19, %c0_20, %c0_21] : memref<1x2x128xbf16, #tpu.memory_space<vmem>>, vector<1x2x128xbf16>
      %28 = vector.shape_cast %27 : vector<1x2x128xbf16> to vector<2x128xbf16>
      %29 = vector.shape_cast %26 : vector<2x128xbf16> to vector<1x2x128xbf16>
      tpu.vector_store %arg6[%c0_19, %c0_20, %c0_21], %29 {strides = array<i32>} : memref<1x2x128xbf16, #tpu.memory_space<vmem>>, vector<1x2x128xbf16>,
    } else {
    }
    return
  }
  func.func @transform_0(%arg0: i32, %arg1: i32, %arg2: i32) -> (i32, i32, i32, i32) {
    %c0_i32 = arith.constant 0 : i32
    %c0_i32_0 = arith.constant 0 : i32
    return %arg0, %arg1, %arg2, %c0_i32 : i32, i32, i32, i32
  }
  func.func @transform_1(%arg0: i32, %arg1: i32, %arg2: i32) -> (i32, i32, i32) {
    %c0_i32 = arith.constant 0 : i32
    %c0_i32_0 = arith.constant 0 : i32
    %c0_i32_1 = arith.constant 0 : i32
    return %arg0, %c0_i32, %c0_i32_0 : i32, i32, i32
  }
  func.func @transform_2(%arg0: i32, %arg1: i32, %arg2: i32) -> (i32, i32, i32) {
    %c0_i32 = arith.constant 0 : i32
    %c0_i32_0 = arith.constant 0 : i32
    %c0_i32_1 = arith.constant 0 : i32
    return %arg0, %c0_i32, %c0_i32_0 : i32, i32, i32
  }
  func.func @transform_3(%arg0: i32, %arg1: i32, %arg2: i32) -> (i32, i32, i32) {
    %c0_i32 = arith.constant 0 : i32
    %c0_i32_0 = arith.constant 0 : i32
    %c0_i32_1 = arith.constant 0 : i32
    return %arg0, %c0_i32, %c0_i32_0 : i32, i32, i32
  }
}

module attributes {stable_mosaic.version = 11 : i64} {
  func.func @_tail_kernel(%arg0: i32, %arg1: i32, %arg2: memref<1x2x128xbf16, #tpu.memory_space<vmem>>, %arg3: memref<1x128x512xbf16, #tpu.memory_space<vmem>>, %arg4: memref<1x1x512xf32, #tpu.memory_space<vmem>>, %arg5: memref<1x512x256xbf16, #tpu.memory_space<vmem>>, %arg6: memref<1x1x128xf32, #tpu.memory_space<vmem>>, %arg7: memref<1x128xf32, #tpu.memory_space<vmem>>, %arg8: memref<1x2x512xbf16, #tpu.memory_space<vmem>>, %arg9: memref<1x2x128xf32, #tpu.memory_space<vmem>>, %arg10: memref<2x128xf32, #tpu.memory_space<vmem>>) attributes {dimension_semantics = [#tpu.dimension_semantics<parallel>, #tpu.dimension_semantics<arbitrary>], iteration_bounds = array<i64: 1, 3>, scalar_prefetch = 0 : i64, scratch_operands = 0 : i64, tpu.core_type = #tpu.core_type<tc>, window_params = [{transform_indices = @transform_0, window_bounds = array<i64: 1, 2, 128>}, {transform_indices = @transform_1, window_bounds = array<i64: 1, 128, 512>}, {transform_indices = @transform_2, window_bounds = array<i64: 1, 1, 512>}, {transform_indices = @transform_3, window_bounds = array<i64: 1, 512, 256>}, {transform_indices = @transform_4, window_bounds = array<i64: 1, 1, 128>}, {pipeline_mode = #tpu.pipeline_mode<synchronous>, transform_indices = @transform_5, window_bounds = array<i64: 1, 128>}, {transform_indices = @transform_6, window_bounds = array<i64: 1, 2, 512>}, {transform_indices = @transform_7, window_bounds = array<i64: 1, 2, 128>}, {transform_indices = @transform_8, window_bounds = array<i64: 2, 128>}]} {
    %c0 = arith.constant 0 : index
    %c0_0 = arith.constant 0 : index
    %c0_1 = arith.constant 0 : index
    %0 = vector.load %arg2[%c0, %c0_0, %c0_1] : memref<1x2x128xbf16, #tpu.memory_space<vmem>>, vector<1x2x128xbf16>
    %1 = vector.shape_cast %0 : vector<1x2x128xbf16> to vector<2x128xbf16>
    %c0_2 = arith.constant 0 : index
    %c0_3 = arith.constant 0 : index
    %c0_4 = arith.constant 0 : index
    %2 = vector.load %arg3[%c0_2, %c0_3, %c0_4] : memref<1x128x512xbf16, #tpu.memory_space<vmem>>, vector<1x128x512xbf16>
    %3 = vector.shape_cast %2 : vector<1x128x512xbf16> to vector<128x512xbf16>
    %cst = arith.constant dense<0.000000e+00> : vector<2x512xf32>
    %4 = tpu.matmul %1, %3, %cst {dimension_numbers = #tpu.dot_dimension_numbers<[1], [0], [0], [1], [0, 0, 1, 1], [], []>} : vector<2x128xbf16>, vector<128x512xbf16>, vector<2x512xf32> -> vector<2x512xf32>
    %c0_5 = arith.constant 0 : index
    %c0_6 = arith.constant 0 : index
    %c0_7 = arith.constant 0 : index
    %5 = vector.load %arg4[%c0_5, %c0_6, %c0_7] : memref<1x1x512xf32, #tpu.memory_space<vmem>>, vector<1x1x512xf32>
    %6 = vector.shape_cast %5 : vector<1x1x512xf32> to vector<1x512xf32>
    %7 = vector.broadcast %6 : vector<1x512xf32> to vector<2x512xf32>
    %8 = arith.addf %4, %7 : vector<2x512xf32>
    %cst_8 = arith.constant 0.000000e+00 : f32
    %9 = vector.broadcast %cst_8 : f32 to vector<2x512xf32>
    %10 = arith.maximumf %8, %9 : vector<2x512xf32>
    %11 = arith.truncf %10 : vector<2x512xf32> to vector<2x512xbf16>
    %c0_9 = arith.constant 0 : index
    %c0_10 = arith.constant 0 : index
    %c0_11 = arith.constant 0 : index
    %12 = vector.load %arg8[%c0_9, %c0_10, %c0_11] : memref<1x2x512xbf16, #tpu.memory_space<vmem>>, vector<1x2x512xbf16>
    %13 = vector.shape_cast %12 : vector<1x2x512xbf16> to vector<2x512xbf16>
    %14 = vector.shape_cast %11 : vector<2x512xbf16> to vector<1x2x512xbf16>
    tpu.vector_store %arg8[%c0_9, %c0_10, %c0_11], %14 {strides = array<i32>} : memref<1x2x512xbf16, #tpu.memory_space<vmem>>, vector<1x2x512xbf16>,
    %15 = arith.truncf %10 : vector<2x512xf32> to vector<2x512xbf16>
    %c0_12 = arith.constant 0 : index
    %c0_13 = arith.constant 0 : index
    %c0_14 = arith.constant 0 : index
    %16 = vector.load %arg5[%c0_12, %c0_13, %c0_14] : memref<1x512x256xbf16, #tpu.memory_space<vmem>>, vector<1x512x256xbf16>
    %17 = vector.shape_cast %16 : vector<1x512x256xbf16> to vector<512x256xbf16>
    %cst_15 = arith.constant dense<0.000000e+00> : vector<2x256xf32>
    %18 = tpu.matmul %15, %17, %cst_15 {dimension_numbers = #tpu.dot_dimension_numbers<[1], [0], [0], [1], [0, 0, 1, 1], [], []>} : vector<2x512xbf16>, vector<512x256xbf16>, vector<2x256xf32> -> vector<2x256xf32>
    %19 = vector.extract_strided_slice %18 {offsets = [0, 0], sizes = [2, 128], strides = [1, 1]} : vector<2x256xf32> to vector<2x128xf32>
    %c0_16 = arith.constant 0 : index
    %c0_17 = arith.constant 0 : index
    %c0_18 = arith.constant 0 : index
    %20 = vector.load %arg6[%c0_16, %c0_17, %c0_18] : memref<1x1x128xf32, #tpu.memory_space<vmem>>, vector<1x1x128xf32>
    %21 = vector.shape_cast %20 : vector<1x1x128xf32> to vector<1x128xf32>
    %22 = vector.broadcast %21 : vector<1x128xf32> to vector<2x128xf32>
    %23 = arith.addf %19, %22 : vector<2x128xf32>
    %c0_19 = arith.constant 0 : index
    %c0_20 = arith.constant 0 : index
    %c0_21 = arith.constant 0 : index
    %24 = vector.load %arg9[%c0_19, %c0_20, %c0_21] : memref<1x2x128xf32, #tpu.memory_space<vmem>>, vector<1x2x128xf32>
    %25 = vector.shape_cast %24 : vector<1x2x128xf32> to vector<2x128xf32>
    %26 = vector.shape_cast %23 : vector<2x128xf32> to vector<1x2x128xf32>
    tpu.vector_store %arg9[%c0_19, %c0_20, %c0_21], %26 {strides = array<i32>} : memref<1x2x128xf32, #tpu.memory_space<vmem>>, vector<1x2x128xf32>,
    %27 = vector.extract_strided_slice %18 {offsets = [0, 128], sizes = [2, 128], strides = [1, 1]} : vector<2x256xf32> to vector<2x128xf32>
    %c0_i32 = arith.constant 0 : i32
    %28 = arith.cmpi eq, %arg1, %c0_i32 : i32
    %29 = arith.extui %28 : i1 to i32
    %c0_i32_22 = arith.constant 0 : i32
    %30 = arith.cmpi ne, %29, %c0_i32_22 : i32
    scf.if %30 {
      %c0_25 = arith.constant 0 : index
      %c0_26 = arith.constant 0 : index
      %34 = vector.load %arg7[%c0_25, %c0_26] : memref<1x128xf32, #tpu.memory_space<vmem>>, vector<1x128xf32>
      %35 = vector.broadcast %34 : vector<1x128xf32> to vector<2x128xf32>
      %36 = arith.addf %35, %27 : vector<2x128xf32>
      %c0_27 = arith.constant 0 : index
      %c0_28 = arith.constant 0 : index
      %37 = vector.load %arg10[%c0_27, %c0_28] : memref<2x128xf32, #tpu.memory_space<vmem>>, vector<2x128xf32>
      tpu.vector_store %arg10[%c0_27, %c0_28], %36 {strides = array<i32>} : memref<2x128xf32, #tpu.memory_space<vmem>>, vector<2x128xf32>,
    } else {
    }
    %c0_i32_23 = arith.constant 0 : i32
    %31 = arith.cmpi sgt, %arg1, %c0_i32_23 : i32
    %32 = arith.extui %31 : i1 to i32
    %c0_i32_24 = arith.constant 0 : i32
    %33 = arith.cmpi ne, %32, %c0_i32_24 : i32
    scf.if %33 {
      %c0_25 = arith.constant 0 : index
      %c0_26 = arith.constant 0 : index
      %34 = vector.load %arg10[%c0_25, %c0_26] : memref<2x128xf32, #tpu.memory_space<vmem>>, vector<2x128xf32>
      %35 = arith.addf %34, %27 : vector<2x128xf32>
      %c0_27 = arith.constant 0 : index
      %c0_28 = arith.constant 0 : index
      %36 = vector.load %arg10[%c0_27, %c0_28] : memref<2x128xf32, #tpu.memory_space<vmem>>, vector<2x128xf32>
      tpu.vector_store %arg10[%c0_27, %c0_28], %35 {strides = array<i32>} : memref<2x128xf32, #tpu.memory_space<vmem>>, vector<2x128xf32>,
    } else {
    }
    return
  }
  func.func @transform_0(%arg0: i32, %arg1: i32) -> (i32, i32, i32) {
    %c0_i32 = arith.constant 0 : i32
    %c0_i32_0 = arith.constant 0 : i32
    return %arg1, %arg0, %c0_i32 : i32, i32, i32
  }
  func.func @transform_1(%arg0: i32, %arg1: i32) -> (i32, i32, i32) {
    %c0_i32 = arith.constant 0 : i32
    %c0_i32_0 = arith.constant 0 : i32
    %c0_i32_1 = arith.constant 0 : i32
    return %arg1, %c0_i32, %c0_i32_0 : i32, i32, i32
  }
  func.func @transform_2(%arg0: i32, %arg1: i32) -> (i32, i32, i32) {
    %c0_i32 = arith.constant 0 : i32
    %c0_i32_0 = arith.constant 0 : i32
    %c0_i32_1 = arith.constant 0 : i32
    return %arg1, %c0_i32, %c0_i32_0 : i32, i32, i32
  }
  func.func @transform_3(%arg0: i32, %arg1: i32) -> (i32, i32, i32) {
    %c0_i32 = arith.constant 0 : i32
    %c0_i32_0 = arith.constant 0 : i32
    %c0_i32_1 = arith.constant 0 : i32
    return %arg1, %c0_i32, %c0_i32_0 : i32, i32, i32
  }
  func.func @transform_4(%arg0: i32, %arg1: i32) -> (i32, i32, i32) {
    %c0_i32 = arith.constant 0 : i32
    %c0_i32_0 = arith.constant 0 : i32
    %c0_i32_1 = arith.constant 0 : i32
    return %arg1, %c0_i32, %c0_i32_0 : i32, i32, i32
  }
  func.func @transform_5(%arg0: i32, %arg1: i32) -> (i32, i32) {
    %c0_i32 = arith.constant 0 : i32
    %c0_i32_0 = arith.constant 0 : i32
    %c0_i32_1 = arith.constant 0 : i32
    return %c0_i32, %c0_i32_0 : i32, i32
  }
  func.func @transform_6(%arg0: i32, %arg1: i32) -> (i32, i32, i32) {
    %c0_i32 = arith.constant 0 : i32
    %c0_i32_0 = arith.constant 0 : i32
    return %arg1, %arg0, %c0_i32 : i32, i32, i32
  }
  func.func @transform_7(%arg0: i32, %arg1: i32) -> (i32, i32, i32) {
    %c0_i32 = arith.constant 0 : i32
    %c0_i32_0 = arith.constant 0 : i32
    return %arg1, %arg0, %c0_i32 : i32, i32, i32
  }
  func.func @transform_8(%arg0: i32, %arg1: i32) -> (i32, i32) {
    %c0_i32 = arith.constant 0 : i32
    %c0_i32_0 = arith.constant 0 : i32
    return %arg0, %c0_i32 : i32, i32
  }
}

</mosaic_0001>

<llo_original>
// kernel: resnet3modal_forward.2
$region0: #{resnet3modal_forward.2}
  #allocation0 [shape = 'u32[]', space=smem, size = 0x4, offset = 0x4, fixed_abs, tag = 'smem constant byte address 0x4 - core index']
  #allocation1 [shape = 'u32[144,128]{1,0:T(1,128)}', space=vmem, size = 0x12000, scoped, tag = 'internal scratch']
  #allocation2 [shape = 'f32[2,128]{1,0:T(2,128)}', space=vmem, size = 0x400, scoped, tag = 'scratch operand']
  %s0 = inlined_call_operand.vmem [shape: bf16[3,2,256,32], index: 0, kind: input, shape index: {}]
  %s1 = inlined_call_operand.vmem [shape: bf16[3,32,128], index: 1, kind: input, shape index: {}]
  %s2 = inlined_call_operand.vmem [shape: f32[3,1,128], index: 2, kind: input, shape index: {}]
  %s3 = inlined_call_operand.vmem [shape: bf16[3,2,128], index: 3, kind: output, shape index: {}]
  %s4 = sld [smem:[#allocation0]]
  $region57: #{resnet3modal_forward.2} parent=0
    _
  %s6 = ssub.s32 1, %s4
  %s7 = scalar_select 0, %s6, %s4
  loop: start=0, step=1, limit=5
  $region2: #{resnet3modal_forward.2} parent=0 // loop_pre_header
    _
  $region3: #{resnet3modal_forward.2} parent=0 // loop_header
    %s9 = sphi 0, %s13
    %p10 = scmp.ge.s32.totalorder %s9, 5
    %s16 = sphi 0, %s35
    %s17 = sphi 0, %s31
    %s18 = sphi 0, %s27
    %s19 = sphi 0, %s16
    %s20 = sphi 0, %s17
    %s21 = sphi 0, %s18
    %s22 = sphi 0, %s19
    %s23 = sphi 0, %s20
    %s24 = sphi 0, %s21
    %s42 = sphi 0, %s44
    %s45 = sphi 0, %s42
    %s46 = sphi 0, %s45
    %s62 = sphi 0, %s46
    %s68 = sphi 0, %s70
    %s71 = sphi 0, %s68
    %s72 = sphi 0, %s71
    %s88 = sphi 0, %s72
    %s94 = sphi 0, %s96
    %s97 = sphi 0, %s94
    %s98 = sphi 0, %s97
    %s114 = sphi 0, %s98
    %s120 = sphi 0, %s122
    %s123 = sphi 0, %s120
    %s124 = sphi 0, %s123
    %s140 = sphi 0, %s124
  $region4: #{resnet3modal_forward.2} parent=0 // loop_header_branch
    %12 = sbr.rel (%p10) target = $region8
  $region5: #{resnet3modal_forward.2} parent=0 // loop_body
    %s14 = ssub.s32 %s9, 1
    %s15 = ssub.s32 %s9, 2
    %s25 = sadd.s32 1, %s18
    %p26 = scmp.ge.s32.totalorder %s25, 1
    %s27 = scalar_select %p26, 0, %s25
    %s28 = sadd.s32 1, %s17
    %s29 = scalar_select %p26, %s28, %s17
    %p30 = scmp.ge.s32.totalorder %s29, 1
    %s31 = scalar_select %p30, 0, %s29
    %s32 = sadd.s32 1, %s16
    %s33 = scalar_select %p30, %s32, %s16
    %p34 = scmp.ge.s32.totalorder %s33, 3
    %s35 = scalar_select %p34, 0, %s33
    %s36 = ssub.s32 %s16, %s35
    %s37 = ssub.s32 %s17, %s31
    %s38 = sor.u32 %s36, %s37
    %s39 = ssub.s32 %s18, %s27
    %s40 = sor.u32 %s38, %s39
    %p41 = scmp.eq.s32.totalorder %s40, 0
    %s43 = sadd.s32 %s42, 1
    %s44 = scalar_select %p41, %s42, %s43
    %p47 = pneg %p41
    %p48 = scmp.eq.s32.totalorder %s9, 2
    %p49 = por %p47, %p48
    %p50 = scmp.ne.s32.totalorder %s42, %s45
    %p51 = scmp.eq.s32.totalorder %s9, 0
    %p52 = por %p50, %p51
    %p53 = scmp.ne.s32.totalorder %s42, %s45
    %p54 = scmp.eq.s32.totalorder %s14, 2
    %p55 = por %p53, %p54
    %p56 = scmp.ne.s32.totalorder %s45, %s46
    %p57 = scmp.eq.s32.totalorder %s14, 0
    %p58 = por %p56, %p57
    %p59 = scmp.ne.s32.totalorder %s45, %s46
    %p60 = scmp.eq.s32.totalorder %s15, 2
    %p61 = por %p59, %p60
    %p63 = scmp.ne.s32.totalorder %s46, %s62
    %p64 = scmp.eq.s32.totalorder %s15, 0
    %p65 = por %p63, %p64
    %s66 = ssub.s32 %s16, %s35
    %p67 = scmp.eq.s32.totalorder %s66, 0
    %s69 = sadd.s32 %s68, 1
    %s70 = scalar_select %p67, %s68, %s69
    %p73 = pneg %p67
    %p74 = scmp.eq.s32.totalorder %s9, 2
    %p75 = por %p73, %p74
    %p76 = scmp.ne.s32.totalorder %s68, %s71
    %p77 = scmp.eq.s32.totalorder %s9, 0
    %p78 = por %p76, %p77
    %p79 = scmp.ne.s32.totalorder %s68, %s71
    %p80 = scmp.eq.s32.totalorder %s14, 2
    %p81 = por %p79, %p80
    %p82 = scmp.ne.s32.totalorder %s71, %s72
    %p83 = scmp.eq.s32.totalorder %s14, 0
    %p84 = por %p82, %p83
    %p85 = scmp.ne.s32.totalorder %s71, %s72
    %p86 = scmp.eq.s32.totalorder %s15, 2
    %p87 = por %p85, %p86
    %p89 = scmp.ne.s32.totalorder %s72, %s88
    %p90 = scmp.eq.s32.totalorder %s15, 0
    %p91 = por %p89, %p90
    %s92 = ssub.s32 %s16, %s35
    %p93 = scmp.eq.s32.totalorder %s92, 0
    %s95 = sadd.s32 %s94, 1
    %s96 = scalar_select %p93, %s94, %s95
    %p99 = pneg %p93
    %p100 = scmp.eq.s32.totalorder %s9, 2
    %p101 = por %p99, %p100
    %p102 = scmp.ne.s32.totalorder %s94, %s97
    %p103 = scmp.eq.s32.totalorder %s9, 0
    %p104 = por %p102, %p103
    %p105 = scmp.ne.s32.totalorder %s94, %s97
    %p106 = scmp.eq.s32.totalorder %s14, 2
    %p107 = por %p105, %p106
    %p108 = scmp.ne.s32.totalorder %s97, %s98
    %p109 = scmp.eq.s32.totalorder %s14, 0
    %p110 = por %p108, %p109
    %p111 = scmp.ne.s32.totalorder %s97, %s98
    %p112 = scmp.eq.s32.totalorder %s15, 2
    %p113 = por %p111, %p112
    %p115 = scmp.ne.s32.totalorder %s98, %s114
    %p116 = scmp.eq.s32.totalorder %s15, 0
    %p117 = por %p115, %p116
    %s118 = ssub.s32 %s16, %s35
    %p119 = scmp.eq.s32.totalorder %s118, 0
    %s121 = sadd.s32 %s120, 1
    %s122 = scalar_select %p119, %s120, %s121
    %p125 = pneg %p119
    %p126 = scmp.eq.s32.totalorder %s9, 2
    %p127 = por %p125, %p126
    %p128 = scmp.ne.s32.totalorder %s120, %s123
    %p129 = scmp.eq.s32.totalorder %s9, 0
    %p130 = por %p128, %p129
    %p131 = scmp.ne.s32.totalorder %s120, %s123
    %p132 = scmp.eq.s32.totalorder %s14, 2
    %p133 = por %p131, %p132
    %p134 = scmp.ne.s32.totalorder %s123, %s124
    %p135 = scmp.eq.s32.totalorder %s14, 0
    %p136 = por %p134, %p135
    %p137 = scmp.ne.s32.totalorder %s123, %s124
    %p138 = scmp.eq.s32.totalorder %s15, 2
    %p139 = por %p137, %p138
    %p141 = scmp.ne.s32.totalorder %s124, %s140
    %p142 = scmp.eq.s32.totalorder %s15, 0
    %p143 = por %p141, %p142
    %p144 = scmp.le.s32.totalorder 1, %s9
    %p145 = scmp.lt.s32.totalorder %s9, 4
    %p146 = pnand %p144, %p145
    %p147 = pneg %p146
    // Predicated region
    $region9: #{resnet3modal_forward.2} parent=5 // pred_check
      _
    $region10: #{resnet3modal_forward.2} parent=5 // pred_check_branch
      %149 = sbr.rel (%p146) target = $region12
    $region11: #{resnet3modal_forward.2} parent=5 // pred_region
      %s150 = ssub.s32 %s9, 1
    $region12: #{resnet3modal_forward.2} parent=5 // pred_fallthru
      _
    %p151 = scmp.lt.s32.totalorder %s9, 3
    // Predicated region
    $region13: #{resnet3modal_forward.2} parent=5 // pred_check
      %p152 = pneg %p151
    $region14: #{resnet3modal_forward.2} parent=5 // pred_check_branch
      %154 = sbr.rel (%p152) target = $region16
    $region15: #{resnet3modal_forward.2} parent=5 // pred_region
      // Predicated region
      $region17: #{resnet3modal_forward.2} parent=15 // pred_check
        %p155 = pneg %p52
      $region18: #{resnet3modal_forward.2} parent=15 // pred_check_branch
        %157 = sbr.rel (%p155) target = $region20
      $region19: #{resnet3modal_forward.2} parent=15 // pred_region
        %s158 = smul.u32 2, %s17
        %s159 = smul.u32 32, %s18
        %p160 = scmp.lt.s32.totalorder %s16, 2
        %s161 = scalar_select %p160, %s16, 2
        %p162 = scmp.lt.s32.totalorder %s158, 1
        %s163 = scalar_select %p162, %s158, 1
        %p164 = scmp.lt.s32.totalorder %s159, 31
        %s165 = scalar_select %p164, %s159, 31
        %s166 = smul.addr %s163, 32
        %s167 = sadd.s32 %s165, %s166
        %s168 = smul.addr %s161, 64
        %s169 = sadd.s32 %s167, %s168
        %s170 = smul.addr %s169, 4
        %s171 = scalar_lea.vmem %s0, %s170
        %s172 = smul.u32 2, %s17
        %s173 = smul.u32 32, %s18
      $region20: #{resnet3modal_forward.2} parent=15 // pred_fallthru
        _
      // Predicated region
      $region21: #{resnet3modal_forward.2} parent=15 // pred_check
        %p174 = pneg %p78
      $region22: #{resnet3modal_forward.2} parent=15 // pred_check_branch
        %176 = sbr.rel (%p174) target = $region24
      $region23: #{resnet3modal_forward.2} parent=15 // pred_region
        %p177 = scmp.lt.s32.totalorder %s16, 2
        %s178 = scalar_select %p177, %s16, 2
        %s179 = smul.addr %s178, 4
        %s180 = smul.addr %s179, 4
        %s181 = scalar_lea.vmem %s1, %s180
      $region24: #{resnet3modal_forward.2} parent=15 // pred_fallthru
        _
      // Predicated region
      $region25: #{resnet3modal_forward.2} parent=15 // pred_check
        %p182 = pneg %p104
      $region26: #{resnet3modal_forward.2} parent=15 // pred_check_branch
        %184 = sbr.rel (%p182) target = $region28
      $region27: #{resnet3modal_forward.2} parent=15 // pred_region
        %p185 = scmp.lt.s32.totalorder %s16, 2
        %s186 = scalar_select %p185, %s16, 2
        %s187 = scalar_lea.vmem %s2, %s186
      $region28: #{resnet3modal_forward.2} parent=15 // pred_fallthru
        _
    $region16: #{resnet3modal_forward.2} parent=5 // pred_fallthru
      _
    %p188 = scmp.le.s32.totalorder 1, %s9
    %p189 = scmp.lt.s32.totalorder %s9, 4
    %p190 = pnand %p188, %p189
    %p191 = pneg %p190
    // Predicated region
    $region29: #{resnet3modal_forward.2} parent=5 // pred_check
      _
    $region30: #{resnet3modal_forward.2} parent=5 // pred_check_branch
      %193 = sbr.rel (%p190) target = $region32
    $region31: #{resnet3modal_forward.2} parent=5 // pred_region
      %s194 = ssub.s32 %s9, 1
      %s195 = smul.u32 2, %s20
      %s196 = smul.u32 32, %s21
      %p197 = scmp.lt.s32.totalorder %s19, 2
      %s198 = scalar_select %p197, %s19, 2
      %p199 = scmp.lt.s32.totalorder %s195, 1
      %s200 = scalar_select %p199, %s195, 1
      %p201 = scmp.lt.s32.totalorder %s196, 31
      %s202 = scalar_select %p201, %s196, 31
      %s203 = smul.addr %s200, 32
      %s204 = sadd.s32 %s202, %s203
      %s205 = smul.addr %s198, 64
      %s206 = sadd.s32 %s204, %s205
      %s207 = smul.addr %s206, 4
      %s208 = scalar_lea.vmem %s0, %s207
      %p209 = pneg %p58
      %p210 = pneg %p55
      %p211 = scmp.lt.s32.totalorder %s19, 2
      %s212 = scalar_select %p211, %s19, 2
      %s213 = smul.addr %s212, 4
      %s214 = smul.addr %s213, 4
      %s215 = scalar_lea.vmem %s1, %s214
      %p216 = pneg %p84
      %p217 = pneg %p81
      %p218 = scmp.lt.s32.totalorder %s19, 2
      %s219 = scalar_select %p218, %s19, 2
      %s220 = scalar_lea.vmem %s2, %s219
      %p221 = pneg %p110
      %p222 = pneg %p107
      %p223 = pneg %p136
      %p224 = pneg %p133
      %p225 = scmp.lt.s32.totalorder %s19, 2
      %s226 = scalar_select %p225, %s19, 2
      %s227 = scalar_lea.vmem %s3, %s226
      %s228 = smul.u32 2, %s20
      %s229 = smul.u32 32, %s21
      %p230 = scmp.lt.s32.totalorder %s19, 2
      %s231 = scalar_select %p230, %s19, 2
      %p232 = scmp.lt.s32.totalorder %s228, 1
      %s233 = scalar_select %p232, %s228, 1
      %p234 = scmp.lt.s32.totalorder %s229, 31
      %s235 = scalar_select %p234, %s229, 31
      %s236 = smul.addr %s233, 32
      %s237 = sadd.s32 %s235, %s236
      %s238 = smul.addr %s231, 64
      %s239 = sadd.s32 %s237, %s238
      %s240 = smul.addr %s239, 4
      %s241 = scalar_lea.vmem %s0, %s240
      %s242 = smul.u32 2, %s20
      %s243 = smul.u32 32, %s21
      %p244 = scmp.lt.s32.totalorder %s19, 2
      %s245 = scalar_select %p244, %s19, 2
      %s246 = smul.addr %s245, 4
      %s247 = smul.addr %s246, 4
      %s248 = scalar_lea.vmem %s1, %s247
      %p249 = scmp.lt.s32.totalorder %s19, 2
      %s250 = scalar_select %p249, %s19, 2
      %s251 = scalar_lea.vmem %s2, %s250
      %p252 = scmp.lt.s32.totalorder %s19, 2
      %s253 = scalar_select %p252, %s19, 2
      %s254 = scalar_lea.vmem %s3, %s253
      %v256 = vld [vmem:[%s241] sm:$0xf]
      %v257 = vld [vmem:[%s241 + $0x4] sm:$0xf]
      %v258 = vld [vmem:[%s241 + $0x8] sm:$0xf]
      %v259 = vld [vmem:[%s241 + $0xc] sm:$0xf]
      %v260 = vld [vmem:[%s241 + $0x10] sm:$0xf]
      %v261 = vld [vmem:[%s241 + $0x14] sm:$0xf]
      %v262 = vld [vmem:[%s241 + $0x18] sm:$0xf]
      %v263 = vld [vmem:[%s241 + $0x1c] sm:$0xf]
      %v264 = vld [vmem:[%s241 + $0x20] sm:$0xf]
      %v265 = vld [vmem:[%s241 + $0x24] sm:$0xf]
      %v266 = vld [vmem:[%s241 + $0x28] sm:$0xf]
      %v267 = vld [vmem:[%s241 + $0x2c] sm:$0xf]
      %v268 = vld [vmem:[%s241 + $0x30] sm:$0xf]
      %v269 = vld [vmem:[%s241 + $0x34] sm:$0xf]
      %v270 = vld [vmem:[%s241 + $0x38] sm:$0xf]
      %v271 = vld [vmem:[%s241 + $0x3c] sm:$0xf]
      %v272 = vld [vmem:[%s241 + $0x40] sm:$0xf]
      %v273 = vld [vmem:[%s241 + $0x44] sm:$0xf]
      %v274 = vld [vmem:[%s241 + $0x48] sm:$0xf]
      %v275 = vld [vmem:[%s241 + $0x4c] sm:$0xf]
      %v276 = vld [vmem:[%s241 + $0x50] sm:$0xf]
      %v277 = vld [vmem:[%s241 + $0x54] sm:$0xf]
      %v278 = vld [vmem:[%s241 + $0x58] sm:$0xf]
      %v279 = vld [vmem:[%s241 + $0x5c] sm:$0xf]
      %v280 = vld [vmem:[%s241 + $0x60] sm:$0xf]
      %v281 = vld [vmem:[%s241 + $0x64] sm:$0xf]
      %v282 = vld [vmem:[%s241 + $0x68] sm:$0xf]
      %v283 = vld [vmem:[%s241 + $0x6c] sm:$0xf]
      %v284 = vld [vmem:[%s241 + $0x70] sm:$0xf]
      %v285 = vld [vmem:[%s241 + $0x74] sm:$0xf]
      %v286 = vld [vmem:[%s241 + $0x78] sm:$0xf]
      %v287 = vld [vmem:[%s241 + $0x7c] sm:$0xf]
      %v288 = vld [vmem:[%s241 + $0x80] sm:$0xf]
      %v289 = vld [vmem:[%s241 + $0x84] sm:$0xf]
      %v290 = vld [vmem:[%s241 + $0x88] sm:$0xf]
      %v291 = vld [vmem:[%s241 + $0x8c] sm:$0xf]
      %v292 = vld [vmem:[%s241 + $0x90] sm:$0xf]
      %v293 = vld [vmem:[%s241 + $0x94] sm:$0xf]
      %v294 = vld [vmem:[%s241 + $0x98] sm:$0xf]
      %v295 = vld [vmem:[%s241 + $0x9c] sm:$0xf]
      %v296 = vld [vmem:[%s241 + $0xa0] sm:$0xf]
      %v297 = vld [vmem:[%s241 + $0xa4] sm:$0xf]
      %v298 = vld [vmem:[%s241 + $0xa8] sm:$0xf]
      %v299 = vld [vmem:[%s241 + $0xac] sm:$0xf]
      %v300 = vld [vmem:[%s241 + $0xb0] sm:$0xf]
      %v301 = vld [vmem:[%s241 + $0xb4] sm:$0xf]
      %v302 = vld [vmem:[%s241 + $0xb8] sm:$0xf]
      %v303 = vld [vmem:[%s241 + $0xbc] sm:$0xf]
      %v304 = vld [vmem:[%s241 + $0xc0] sm:$0xf]
      %v305 = vld [vmem:[%s241 + $0xc4] sm:$0xf]
      %v306 = vld [vmem:[%s241 + $0xc8] sm:$0xf]
      %v307 = vld [vmem:[%s241 + $0xcc] sm:$0xf]
      %v308 = vld [vmem:[%s241 + $0xd0] sm:$0xf]
      %v309 = vld [vmem:[%s241 + $0xd4] sm:$0xf]
      %v310 = vld [vmem:[%s241 + $0xd8] sm:$0xf]
      %v311 = vld [vmem:[%s241 + $0xdc] sm:$0xf]
      %v312 = vld [vmem:[%s241 + $0xe0] sm:$0xf]
      %v313 = vld [vmem:[%s241 + $0xe4] sm:$0xf]
      %v314 = vld [vmem:[%s241 + $0xe8] sm:$0xf]
      %v315 = vld [vmem:[%s241 + $0xec] sm:$0xf]
      %v316 = vld [vmem:[%s241 + $0xf0] sm:$0xf]
      %v317 = vld [vmem:[%s241 + $0xf4] sm:$0xf]
      %v318 = vld [vmem:[%s241 + $0xf8] sm:$0xf]
      %v319 = vld [vmem:[%s241 + $0xfc] sm:$0xf]
      %v320 = vld [vmem:[%s248] sm:$0xf]
      %v321 = vld [vmem:[%s248 + $0x4] sm:$0xf]
      %v322 = vld [vmem:[%s248 + $0x8] sm:$0xf]
      %v323 = vld [vmem:[%s248 + $0xc] sm:$0xf]
      %v324 = vld [vmem:[%s251] sm:$0x1]
      %v326 = vlaneseq
      %v327 = vshrl.u32 %v326, 7
      %v328 = vsub.s32 0, %v327
      %v329 = vrot.slane %v324, %v328
      %v395 = vunpack.c.l.b16 %v256
      %v396 = vunpack.c.l.b16 %v257
      %v397 = vunpack.c.l.b16 %v258
      %v398 = vunpack.c.l.b16 %v259
      %v399 = vunpack.c.l.b16 %v260
      %v400 = vunpack.c.l.b16 %v261
      %v401 = vunpack.c.l.b16 %v262
      %v402 = vunpack.c.l.b16 %v263
      %v403 = vunpack.c.l.b16 %v264
      %v404 = vunpack.c.l.b16 %v265
      %v405 = vunpack.c.l.b16 %v266
      %v406 = vunpack.c.l.b16 %v267
      %v407 = vunpack.c.l.b16 %v268
      %v408 = vunpack.c.l.b16 %v269
      %v409 = vunpack.c.l.b16 %v270
      %v410 = vunpack.c.l.b16 %v271
      %v411 = vunpack.c.l.b16 %v272
      %v412 = vunpack.c.l.b16 %v273
      %v413 = vunpack.c.l.b16 %v274
      %v414 = vunpack.c.l.b16 %v275
      %v415 = vunpack.c.l.b16 %v276
      %v416 = vunpack.c.l.b16 %v277
      %v417 = vunpack.c.l.b16 %v278
      %v418 = vunpack.c.l.b16 %v279
      %v419 = vunpack.c.l.b16 %v280
      %v420 = vunpack.c.l.b16 %v281
      %v421 = vunpack.c.l.b16 %v282
      %v422 = vunpack.c.l.b16 %v283
      %v423 = vunpack.c.l.b16 %v284
      %v424 = vunpack.c.l.b16 %v285
      %v425 = vunpack.c.l.b16 %v286
      %v426 = vunpack.c.l.b16 %v287
      %v427 = vunpack.c.l.b16 %v288
      %v428 = vunpack.c.l.b16 %v289
      %v429 = vunpack.c.l.b16 %v290
      %v430 = vunpack.c.l.b16 %v291
      %v431 = vunpack.c.l.b16 %v292
      %v432 = vunpack.c.l.b16 %v293
      %v433 = vunpack.c.l.b16 %v294
      %v434 = vunpack.c.l.b16 %v295
      %v435 = vunpack.c.l.b16 %v296
      %v436 = vunpack.c.l.b16 %v297
      %v437 = vunpack.c.l.b16 %v298
      %v438 = vunpack.c.l.b16 %v299
      %v439 = vunpack.c.l.b16 %v300
      %v440 = vunpack.c.l.b16 %v301
      %v441 = vunpack.c.l.b16 %v302
      %v442 = vunpack.c.l.b16 %v303
      %v443 = vunpack.c.l.b16 %v304
      %v444 = vunpack.c.l.b16 %v305
      %v445 = vunpack.c.l.b16 %v306
      %v446 = vunpack.c.l.b16 %v307
      %v447 = vunpack.c.l.b16 %v308
      %v448 = vunpack.c.l.b16 %v309
      %v449 = vunpack.c.l.b16 %v310
      %v450 = vunpack.c.l.b16 %v311
      %v451 = vunpack.c.l.b16 %v312
      %v452 = vunpack.c.l.b16 %v313
      %v453 = vunpack.c.l.b16 %v314
      %v454 = vunpack.c.l.b16 %v315
      %v455 = vunpack.c.l.b16 %v316
      %v456 = vunpack.c.l.b16 %v317
      %v457 = vunpack.c.l.b16 %v318
      %v458 = vunpack.c.l.b16 %v319
      %v459 = vpack.c.b16 %v396, %v395
      %v460 = vpack.c.b16 %v398, %v397
      %v461 = vpack.c.b16 %v400, %v399
      %v462 = vpack.c.b16 %v402, %v401
      %v463 = vpack.c.b16 %v404, %v403
      %v464 = vpack.c.b16 %v406, %v405
      %v465 = vpack.c.b16 %v408, %v407
      %v466 = vpack.c.b16 %v410, %v409
      %v467 = vpack.c.b16 %v412, %v411
      %v468 = vpack.c.b16 %v414, %v413
      %v469 = vpack.c.b16 %v416, %v415
      %v470 = vpack.c.b16 %v418, %v417
      %v471 = vpack.c.b16 %v420, %v419
      %v472 = vpack.c.b16 %v422, %v421
      %v473 = vpack.c.b16 %v424, %v423
      %v474 = vpack.c.b16 %v426, %v425
      %v475 = vpack.c.b16 %v428, %v427
      %v476 = vpack.c.b16 %v430, %v429
      %v477 = vpack.c.b16 %v432, %v431
      %v478 = vpack.c.b16 %v434, %v433
      %v479 = vpack.c.b16 %v436, %v435
      %v480 = vpack.c.b16 %v438, %v437
      %v481 = vpack.c.b16 %v440, %v439
      %v482 = vpack.c.b16 %v442, %v441
      %v483 = vpack.c.b16 %v444, %v443
      %v484 = vpack.c.b16 %v446, %v445
      %v485 = vpack.c.b16 %v448, %v447
      %v486 = vpack.c.b16 %v450, %v449
      %v487 = vpack.c.b16 %v452, %v451
      %v488 = vpack.c.b16 %v454, %v453
      %v489 = vpack.c.b16 %v456, %v455
      %v490 = vpack.c.b16 %v458, %v457
      %v495 = vunpack.c.l.b16 %v320
      %v496 = vunpack.c.l.b16 %v321
      %v497 = vunpack.c.l.b16 %v322
      %v498 = vunpack.c.l.b16 %v323
      %v499 = vpack.c.b16 %v496, %v495
      %v500 = vpack.c.b16 %v498, %v497
      %vm503 = vcmask 261120
      %v505 = vsel %vm503, %v459, 0
      %v508 = vsel %vm503, %v460, 0
      %v511 = vsel %vm503, %v461, 0
      %v514 = vsel %vm503, %v462, 0
      %v517 = vsel %vm503, %v463, 0
      %v520 = vsel %vm503, %v464, 0
      %v523 = vsel %vm503, %v465, 0
      %v526 = vsel %vm503, %v466, 0
      %v529 = vsel %vm503, %v467, 0
      %v532 = vsel %vm503, %v468, 0
      %v535 = vsel %vm503, %v469, 0
      %v538 = vsel %vm503, %v470, 0
      %v541 = vsel %vm503, %v471, 0
      %v544 = vsel %vm503, %v472, 0
      %v547 = vsel %vm503, %v473, 0
      %v550 = vsel %vm503, %v474, 0
      %v553 = vsel %vm503, %v475, 0
      %v556 = vsel %vm503, %v476, 0
      %v559 = vsel %vm503, %v477, 0
      %v562 = vsel %vm503, %v478, 0
      %v565 = vsel %vm503, %v479, 0
      %v568 = vsel %vm503, %v480, 0
      %v571 = vsel %vm503, %v481, 0
      %v574 = vsel %vm503, %v482, 0
      %v577 = vsel %vm503, %v483, 0
      %v580 = vsel %vm503, %v484, 0
      %v583 = vsel %vm503, %v485, 0
      %v586 = vsel %vm503, %v486, 0
      %v589 = vsel %vm503, %v487, 0
      %v592 = vsel %vm503, %v488, 0
      %v595 = vsel %vm503, %v489, 0
      %v598 = vsel %vm503, %v490, 0
      %600 = vmatprep.subr.bf16.mxu0 0
      %601 = vmatpush1.bf16.msra.mxu0 %v499
      %602 = vmatprep.subr.bf16.mxu0 0
      %603 = vmatpush1.bf16.msra.mxu0 %v500
      %604 = vmatprep.subr.bf16.mxu0 0
      %605 = vmatpush1.bf16.msra.mxu0 0
      %606 = vmatprep.subr.bf16.mxu0 0
      %607 = vmatpush1.bf16.msra.mxu0 0
      %608 = vmatprep.subr.bf16.mxu0 0
      %609 = vmatpush1.bf16.msra.mxu0 0
      %610 = vmatprep.subr.bf16.mxu0 0
      %611 = vmatpush1.bf16.msra.mxu0 0
      %612 = vmatprep.subr.bf16.mxu0 0
      %613 = vmatpush1.bf16.msra.mxu0 0
      %614 = vmatprep.subr.bf16.mxu0 0
      %615 = vmatpush1.bf16.msra.mxu0 0
      %616 = vmatprep.subr.bf16.mxu0 0
      %617 = vmatpush1.bf16.msra.mxu0 0
      %618 = vmatprep.subr.bf16.mxu0 0
      %619 = vmatpush1.bf16.msra.mxu0 0
      %620 = vmatprep.subr.bf16.mxu0 0
      %621 = vmatpush1.bf16.msra.mxu0 0
      %622 = vmatprep.subr.bf16.mxu0 0
      %623 = vmatpush1.bf16.msra.mxu0 0
      %624 = vmatprep.subr.bf16.mxu0 0
      %625 = vmatpush1.bf16.msra.mxu0 0
      %626 = vmatprep.subr.bf16.mxu0 0
      %627 = vmatpush1.bf16.msra.mxu0 0
      %628 = vmatprep.subr.bf16.mxu0 0
      %629 = vmatpush1.bf16.msra.mxu0 0
      %630 = vmatprep.subr.bf16.mxu0 0
      %631 = vmatpush1.bf16.msra.mxu0 0
      %632 = vmatprep.mubr.bf16.mxu0 0
      %633 = vmatmul.mubr.bf16.gmra.mrb[0].mxu0 %v505
      %v634 = vpop.f32.mrb[0].mxu0
      %v635 = vadd.f32 %v329, %v634
      %v636 = vpop.f32.mrb[0].mxu0
      %v637 = vpop.f32.mrb[0].mxu0
      %v638 = vadd.f32 %v329, %v637
      %v639 = vpop.f32.mrb[0].mxu0
      %640 = vmatprep.mubr.bf16.mxu0 0
      %641 = vmatmul.mubr.bf16.gmra.mrb[0].mxu0 %v508
      %v642 = vpop.f32.mrb[0].mxu0
      %v643 = vadd.f32 %v329, %v642
      %v644 = vpop.f32.mrb[0].mxu0
      %v645 = vpop.f32.mrb[0].mxu0
      %v646 = vadd.f32 %v329, %v645
      %v647 = vpop.f32.mrb[0].mxu0
      %648 = vmatprep.mubr.bf16.mxu0 0
      %649 = vmatmul.mubr.bf16.gmra.mrb[0].mxu0 %v511
      %v650 = vpop.f32.mrb[0].mxu0
      %v651 = vadd.f32 %v329, %v650
      %v652 = vpop.f32.mrb[0].mxu0
      %v653 = vpop.f32.mrb[0].mxu0
      %v654 = vadd.f32 %v329, %v653
      %v655 = vpop.f32.mrb[0].mxu0
      %656 = vmatprep.mubr.bf16.mxu0 0
      %657 = vmatmul.mubr.bf16.gmra.mrb[0].mxu0 %v514
      %v658 = vpop.f32.mrb[0].mxu0
      %v659 = vadd.f32 %v329, %v658
      %v660 = vpop.f32.mrb[0].mxu0
      %v661 = vpop.f32.mrb[0].mxu0
      %v662 = vadd.f32 %v329, %v661
      %v663 = vpop.f32.mrb[0].mxu0
      %664 = vmatprep.mubr.bf16.mxu0 0
      %665 = vmatmul.mubr.bf16.gmra.mrb[0].mxu0 %v517
      %v666 = vpop.f32.mrb[0].mxu0
      %v667 = vadd.f32 %v329, %v666
      %v668 = vpop.f32.mrb[0].mxu0
      %v669 = vpop.f32.mrb[0].mxu0
      %v670 = vadd.f32 %v329, %v669
      %v671 = vpop.f32.mrb[0].mxu0
      %672 = vmatprep.mubr.bf16.mxu0 0
      %673 = vmatmul.mubr.bf16.gmra.mrb[0].mxu0 %v520
      %v674 = vpop.f32.mrb[0].mxu0
      %v675 = vadd.f32 %v329, %v674
      %v676 = vpop.f32.mrb[0].mxu0
      %v677 = vpop.f32.mrb[0].mxu0
      %v678 = vadd.f32 %v329, %v677
      %v679 = vpop.f32.mrb[0].mxu0
      %680 = vmatprep.mubr.bf16.mxu0 0
      %681 = vmatmul.mubr.bf16.gmra.mrb[0].mxu0 %v523
      %v682 = vpop.f32.mrb[0].mxu0
      %v683 = vadd.f32 %v329, %v682
      %v684 = vpop.f32.mrb[0].mxu0
      %v685 = vpop.f32.mrb[0].mxu0
      %v686 = vadd.f32 %v329, %v685
      %v687 = vpop.f32.mrb[0].mxu0
      %688 = vmatprep.mubr.bf16.mxu0 0
      %689 = vmatmul.mubr.bf16.gmra.mrb[0].mxu0 %v526
      %v690 = vpop.f32.mrb[0].mxu0
      %v691 = vadd.f32 %v329, %v690
      %v692 = vpop.f32.mrb[0].mxu0
      %v693 = vpop.f32.mrb[0].mxu0
      %v694 = vadd.f32 %v329, %v693
      %v695 = vpop.f32.mrb[0].mxu0
      %696 = vmatprep.mubr.bf16.mxu0 0
      %697 = vmatmul.mubr.bf16.gmra.mrb[0].mxu0 %v529
      %v698 = vpop.f32.mrb[0].mxu0
      %v699 = vadd.f32 %v329, %v698
      %v700 = vpop.f32.mrb[0].mxu0
      %v701 = vpop.f32.mrb[0].mxu0
      %v702 = vadd.f32 %v329, %v701
      %v703 = vpop.f32.mrb[0].mxu0
      %704 = vmatprep.mubr.bf16.mxu0 0
      %705 = vmatmul.mubr.bf16.gmra.mrb[0].mxu0 %v532
      %v706 = vpop.f32.mrb[0].mxu0
      %v707 = vadd.f32 %v329, %v706
      %v708 = vpop.f32.mrb[0].mxu0
      %v709 = vpop.f32.mrb[0].mxu0
      %v710 = vadd.f32 %v329, %v709
      %v711 = vpop.f32.mrb[0].mxu0
      %712 = vmatprep.mubr.bf16.mxu0 0
      %713 = vmatmul.mubr.bf16.gmra.mrb[0].mxu0 %v535
      %v714 = vpop.f32.mrb[0].mxu0
      %v715 = vadd.f32 %v329, %v714
      %v716 = vpop.f32.mrb[0].mxu0
      %v717 = vpop.f32.mrb[0].mxu0
      %v718 = vadd.f32 %v329, %v717
      %v719 = vpop.f32.mrb[0].mxu0
      %720 = vmatprep.mubr.bf16.mxu0 0
      %721 = vmatmul.mubr.bf16.gmra.mrb[0].mxu0 %v538
      %v722 = vpop.f32.mrb[0].mxu0
      %v723 = vadd.f32 %v329, %v722
      %v724 = vpop.f32.mrb[0].mxu0
      %v725 = vpop.f32.mrb[0].mxu0
      %v726 = vadd.f32 %v329, %v725
      %v727 = vpop.f32.mrb[0].mxu0
      %728 = vmatprep.mubr.bf16.mxu0 0
      %729 = vmatmul.mubr.bf16.gmra.mrb[0].mxu0 %v541
      %v730 = vpop.f32.mrb[0].mxu0
      %v731 = vadd.f32 %v329, %v730
      %v732 = vpop.f32.mrb[0].mxu0
      %v733 = vpop.f32.mrb[0].mxu0
      %v734 = vadd.f32 %v329, %v733
      %v735 = vpop.f32.mrb[0].mxu0
      %736 = vmatprep.mubr.bf16.mxu0 0
      %737 = vmatmul.mubr.bf16.gmra.mrb[0].mxu0 %v544
      %v738 = vpop.f32.mrb[0].mxu0
      %v739 = vadd.f32 %v329, %v738
      %v740 = vpop.f32.mrb[0].mxu0
      %v741 = vpop.f32.mrb[0].mxu0
      %v742 = vadd.f32 %v329, %v741
      %v743 = vpop.f32.mrb[0].mxu0
      %744 = vmatprep.mubr.bf16.mxu0 0
      %745 = vmatmul.mubr.bf16.gmra.mrb[0].mxu0 %v547
      %v746 = vpop.f32.mrb[0].mxu0
      %v747 = vadd.f32 %v329, %v746
      %v748 = vpop.f32.mrb[0].mxu0
      %v749 = vpop.f32.mrb[0].mxu0
      %v750 = vadd.f32 %v329, %v749
      %v751 = vpop.f32.mrb[0].mxu0
      %752 = vmatprep.mubr.bf16.mxu0 0
      %753 = vmatmul.mubr.bf16.gmra.mrb[0].mxu0 %v550
      %v754 = vpop.f32.mrb[0].mxu0
      %v755 = vadd.f32 %v329, %v754
      %v756 = vpop.f32.mrb[0].mxu0
      %v757 = vpop.f32.mrb[0].mxu0
      %v758 = vadd.f32 %v329, %v757
      %v759 = vpop.f32.mrb[0].mxu0
      %760 = vmatprep.mubr.bf16.mxu0 0
      %761 = vmatmul.mubr.bf16.gmra.mrb[0].mxu0 %v553
      %v762 = vpop.f32.mrb[0].mxu0
      %v763 = vadd.f32 %v329, %v762
      %v764 = vpop.f32.mrb[0].mxu0
      %v765 = vpop.f32.mrb[0].mxu0
      %v766 = vadd.f32 %v329, %v765
      %v767 = vpop.f32.mrb[0].mxu0
      %768 = vmatprep.mubr.bf16.mxu0 0
      %769 = vmatmul.mubr.bf16.gmra.mrb[0].mxu0 %v556
      %v770 = vpop.f32.mrb[0].mxu0
      %v771 = vadd.f32 %v329, %v770
      %v772 = vpop.f32.mrb[0].mxu0
      %v773 = vpop.f32.mrb[0].mxu0
      %v774 = vadd.f32 %v329, %v773
      %v775 = vpop.f32.mrb[0].mxu0
      %776 = vmatprep.mubr.bf16.mxu0 0
      %777 = vmatmul.mubr.bf16.gmra.mrb[0].mxu0 %v559
      %v778 = vpop.f32.mrb[0].mxu0
      %v779 = vadd.f32 %v329, %v778
      %v780 = vpop.f32.mrb[0].mxu0
      %v781 = vpop.f32.mrb[0].mxu0
      %v782 = vadd.f32 %v329, %v781
      %v783 = vpop.f32.mrb[0].mxu0
      %784 = vmatprep.mubr.bf16.mxu0 0
      %785 = vmatmul.mubr.bf16.gmra.mrb[0].mxu0 %v562
      %v786 = vpop.f32.mrb[0].mxu0
      %v787 = vadd.f32 %v329, %v786
      %v788 = vpop.f32.mrb[0].mxu0
      %v789 = vpop.f32.mrb[0].mxu0
      %v790 = vadd.f32 %v329, %v789
      %v791 = vpop.f32.mrb[0].mxu0
      %792 = vmatprep.mubr.bf16.mxu0 0
      %793 = vmatmul.mubr.bf16.gmra.mrb[0].mxu0 %v565
      %v794 = vpop.f32.mrb[0].mxu0
      %v795 = vadd.f32 %v329, %v794
      %v796 = vpop.f32.mrb[0].mxu0
      %v797 = vpop.f32.mrb[0].mxu0
      %v798 = vadd.f32 %v329, %v797
      %v799 = vpop.f32.mrb[0].mxu0
      %800 = vmatprep.mubr.bf16.mxu0 0
      %801 = vmatmul.mubr.bf16.gmra.mrb[0].mxu0 %v568
      %v802 = vpop.f32.mrb[0].mxu0
      %v803 = vadd.f32 %v329, %v802
      %v804 = vpop.f32.mrb[0].mxu0
      %v805 = vpop.f32.mrb[0].mxu0
      %v806 = vadd.f32 %v329, %v805
      %v807 = vpop.f32.mrb[0].mxu0
      %808 = vmatprep.mubr.bf16.mxu0 0
      %809 = vmatmul.mubr.bf16.gmra.mrb[0].mxu0 %v571
      %v810 = vpop.f32.mrb[0].mxu0
      %v811 = vadd.f32 %v329, %v810
      %v812 = vpop.f32.mrb[0].mxu0
      %v813 = vpop.f32.mrb[0].mxu0
      %v814 = vadd.f32 %v329, %v813
      %v815 = vpop.f32.mrb[0].mxu0
      %816 = vmatprep.mubr.bf16.mxu0 0
      %817 = vmatmul.mubr.bf16.gmra.mrb[0].mxu0 %v574
      %v818 = vpop.f32.mrb[0].mxu0
      %v819 = vadd.f32 %v329, %v818
      %v820 = vpop.f32.mrb[0].mxu0
      %v821 = vpop.f32.mrb[0].mxu0
      %v822 = vadd.f32 %v329, %v821
      %v823 = vpop.f32.mrb[0].mxu0
      %824 = vmatprep.mubr.bf16.mxu0 0
      %825 = vmatmul.mubr.bf16.gmra.mrb[0].mxu0 %v577
      %v826 = vpop.f32.mrb[0].mxu0
      %v827 = vadd.f32 %v329, %v826
      %v828 = vpop.f32.mrb[0].mxu0
      %v829 = vpop.f32.mrb[0].mxu0
      %v830 = vadd.f32 %v329, %v829
      %v831 = vpop.f32.mrb[0].mxu0
      %832 = vmatprep.mubr.bf16.mxu0 0
      %833 = vmatmul.mubr.bf16.gmra.mrb[0].mxu0 %v580
      %v834 = vpop.f32.mrb[0].mxu0
      %v835 = vadd.f32 %v329, %v834
      %v836 = vpop.f32.mrb[0].mxu0
      %v837 = vpop.f32.mrb[0].mxu0
      %v838 = vadd.f32 %v329, %v837
      %v839 = vpop.f32.mrb[0].mxu0
      %840 = vmatprep.mubr.bf16.mxu0 0
      %841 = vmatmul.mubr.bf16.gmra.mrb[0].mxu0 %v583
      %v842 = vpop.f32.mrb[0].mxu0
      %v843 = vadd.f32 %v329, %v842
      %v844 = vpop.f32.mrb[0].mxu0
      %v845 = vpop.f32.mrb[0].mxu0
      %v846 = vadd.f32 %v329, %v845
      %v847 = vpop.f32.mrb[0].mxu0
      %848 = vmatprep.mubr.bf16.mxu0 0
      %849 = vmatmul.mubr.bf16.gmra.mrb[0].mxu0 %v586
      %v850 = vpop.f32.mrb[0].mxu0
      %v851 = vadd.f32 %v329, %v850
      %v852 = vpop.f32.mrb[0].mxu0
      %v853 = vpop.f32.mrb[0].mxu0
      %v854 = vadd.f32 %v329, %v853
      %v855 = vpop.f32.mrb[0].mxu0
      %856 = vmatprep.mubr.bf16.mxu0 0
      %857 = vmatmul.mubr.bf16.gmra.mrb[0].mxu0 %v589
      %v858 = vpop.f32.mrb[0].mxu0
      %v859 = vadd.f32 %v329, %v858
      %v860 = vpop.f32.mrb[0].mxu0
      %v861 = vpop.f32.mrb[0].mxu0
      %v862 = vadd.f32 %v329, %v861
      %v863 = vpop.f32.mrb[0].mxu0
      %864 = vmatprep.mubr.bf16.mxu0 0
      %865 = vmatmul.mubr.bf16.gmra.mrb[0].mxu0 %v592
      %v866 = vpop.f32.mrb[0].mxu0
      %v867 = vadd.f32 %v329, %v866
      %v868 = vpop.f32.mrb[0].mxu0
      %v869 = vpop.f32.mrb[0].mxu0
      %v870 = vadd.f32 %v329, %v869
      %v871 = vpop.f32.mrb[0].mxu0
      %872 = vmatprep.mubr.bf16.mxu0 0
      %873 = vmatmul.mubr.bf16.gmra.mrb[0].mxu0 %v595
      %v874 = vpop.f32.mrb[0].mxu0
      %v875 = vadd.f32 %v329, %v874
      %v876 = vpop.f32.mrb[0].mxu0
      %v877 = vpop.f32.mrb[0].mxu0
      %v878 = vadd.f32 %v329, %v877
      %v879 = vpop.f32.mrb[0].mxu0
      %880 = vmatprep.mubr.bf16.mxu0 0
      %881 = vmatmul.mubr.bf16.gmra.mrb[0].mxu0 %v598
      %v882 = vpop.f32.mrb[0].mxu0
      %v883 = vadd.f32 %v329, %v882
      %v884 = vpop.f32.mrb[0].mxu0
      %v885 = vpop.f32.mrb[0].mxu0
      %v886 = vadd.f32 %v329, %v885
      %v887 = vpop.f32.mrb[0].mxu0
      %888 = vdwg.mxu0
      %v889 = vmax.f32 %v635, 0.0
      %v890 = vmax.f32 %v638, 0.0
      %v891 = vmax.f32 %v643, 0.0
      %v892 = vmax.f32 %v646, 0.0
      %v893 = vmax.f32 %v651, 0.0
      %v894 = vmax.f32 %v654, 0.0
      %v895 = vmax.f32 %v659, 0.0
      %v896 = vmax.f32 %v662, 0.0
      %v897 = vmax.f32 %v667, 0.0
      %v898 = vmax.f32 %v670, 0.0
      %v899 = vmax.f32 %v675, 0.0
      %v900 = vmax.f32 %v678, 0.0
      %v901 = vmax.f32 %v683, 0.0
      %v902 = vmax.f32 %v686, 0.0
      %v903 = vmax.f32 %v691, 0.0
      %v904 = vmax.f32 %v694, 0.0
      %v905 = vmax.f32 %v699, 0.0
      %v906 = vmax.f32 %v702, 0.0
      %v907 = vmax.f32 %v707, 0.0
      %v908 = vmax.f32 %v710, 0.0
      %v909 = vmax.f32 %v715, 0.0
      %v910 = vmax.f32 %v718, 0.0
      %v911 = vmax.f32 %v723, 0.0
      %v912 = vmax.f32 %v726, 0.0
      %v913 = vmax.f32 %v731, 0.0
      %v914 = vmax.f32 %v734, 0.0
      %v915 = vmax.f32 %v739, 0.0
      %v916 = vmax.f32 %v742, 0.0
      %v917 = vmax.f32 %v747, 0.0
      %v918 = vmax.f32 %v750, 0.0
      %v919 = vmax.f32 %v755, 0.0
      %v920 = vmax.f32 %v758, 0.0
      %v921 = vmax.f32 %v763, 0.0
      %v922 = vmax.f32 %v766, 0.0
      %v923 = vmax.f32 %v771, 0.0
      %v924 = vmax.f32 %v774, 0.0
      %v925 = vmax.f32 %v779, 0.0
      %v926 = vmax.f32 %v782, 0.0
      %v927 = vmax.f32 %v787, 0.0
      %v928 = vmax.f32 %v790, 0.0
      %v929 = vmax.f32 %v795, 0.0
      %v930 = vmax.f32 %v798, 0.0
      %v931 = vmax.f32 %v803, 0.0
      %v932 = vmax.f32 %v806, 0.0
      %v933 = vmax.f32 %v811, 0.0
      %v934 = vmax.f32 %v814, 0.0
      %v935 = vmax.f32 %v819, 0.0
      %v936 = vmax.f32 %v822, 0.0
      %v937 = vmax.f32 %v827, 0.0
      %v938 = vmax.f32 %v830, 0.0
      %v939 = vmax.f32 %v835, 0.0
      %v940 = vmax.f32 %v838, 0.0
      %v941 = vmax.f32 %v843, 0.0
      %v942 = vmax.f32 %v846, 0.0
      %v943 = vmax.f32 %v851, 0.0
      %v944 = vmax.f32 %v854, 0.0
      %v945 = vmax.f32 %v859, 0.0
      %v946 = vmax.f32 %v862, 0.0
      %v947 = vmax.f32 %v867, 0.0
      %v948 = vmax.f32 %v870, 0.0
      %v949 = vmax.f32 %v875, 0.0
      %v950 = vmax.f32 %v878, 0.0
      %v951 = vmax.f32 %v883, 0.0
      %v952 = vmax.f32 %v886, 0.0
      %v953 = vadd.f32 %v889, %v890
      %v954 = vadd.f32 %v953, %v891
      %v955 = vadd.f32 %v954, %v892
      %v956 = vadd.f32 %v955, %v893
      %v957 = vadd.f32 %v956, %v894
      %v958 = vadd.f32 %v957, %v895
      %v959 = vadd.f32 %v958, %v896
      %v960 = vadd.f32 %v959, %v897
      %v961 = vadd.f32 %v960, %v898
      %v962 = vadd.f32 %v961, %v899
      %v963 = vadd.f32 %v962, %v900
      %v964 = vadd.f32 %v963, %v901
      %v965 = vadd.f32 %v964, %v902
      %v966 = vadd.f32 %v965, %v903
      %v967 = vadd.f32 %v966, %v904
      %v968 = vadd.f32 %v967, %v905
      %v969 = vadd.f32 %v968, %v906
      %v970 = vadd.f32 %v969, %v907
      %v971 = vadd.f32 %v970, %v908
      %v972 = vadd.f32 %v971, %v909
      %v973 = vadd.f32 %v972, %v910
      %v974 = vadd.f32 %v973, %v911
      %v975 = vadd.f32 %v974, %v912
      %v976 = vadd.f32 %v975, %v913
      %v977 = vadd.f32 %v976, %v914
      %v978 = vadd.f32 %v977, %v915
      %v979 = vadd.f32 %v978, %v916
      %v980 = vadd.f32 %v979, %v917
      %v981 = vadd.f32 %v980, %v918
      %v982 = vadd.f32 %v981, %v919
      %v983 = vadd.f32 %v982, %v920
      %v984 = vrot.slane %v983, 4
      %v985 = vadd.f32 %v983, %v984
      %v986 = vrot.slane %v985, 2
      %v987 = vadd.f32 %v985, %v986
      %v988 = vrot.slane %v987, 1
      %v989 = vadd.f32 %v987, %v988
      %v990 = vadd.f32 %v921, %v922
      %v991 = vadd.f32 %v990, %v923
      %v992 = vadd.f32 %v991, %v924
      %v993 = vadd.f32 %v992, %v925
      %v994 = vadd.f32 %v993, %v926
      %v995 = vadd.f32 %v994, %v927
      %v996 = vadd.f32 %v995, %v928
      %v997 = vadd.f32 %v996, %v929
      %v998 = vadd.f32 %v997, %v930
      %v999 = vadd.f32 %v998, %v931
      %v1000 = vadd.f32 %v999, %v932
      %v1001 = vadd.f32 %v1000, %v933
      %v1002 = vadd.f32 %v1001, %v934
      %v1003 = vadd.f32 %v1002, %v935
      %v1004 = vadd.f32 %v1003, %v936
      %v1005 = vadd.f32 %v1004, %v937
      %v1006 = vadd.f32 %v1005, %v938
      %v1007 = vadd.f32 %v1006, %v939
      %v1008 = vadd.f32 %v1007, %v940
      %v1009 = vadd.f32 %v1008, %v941
      %v1010 = vadd.f32 %v1009, %v942
      %v1011 = vadd.f32 %v1010, %v943
      %v1012 = vadd.f32 %v1011, %v944
      %v1013 = vadd.f32 %v1012, %v945
      %v1014 = vadd.f32 %v1013, %v946
      %v1015 = vadd.f32 %v1014, %v947
      %v1016 = vadd.f32 %v1015, %v948
      %v1017 = vadd.f32 %v1016, %v949
      %v1018 = vadd.f32 %v1017, %v950
      %v1019 = vadd.f32 %v1018, %v951
      %v1020 = vadd.f32 %v1019, %v952
      %v1021 = vrot.slane %v1020, 4
      %v1022 = vadd.f32 %v1020, %v1021
      %v1023 = vrot.slane %v1022, 2
      %v1024 = vadd.f32 %v1022, %v1023
      %v1025 = vrot.slane %v1024, 1
      %v1026 = vadd.f32 %v1024, %v1025
      %p1027 = scmp.eq.s32.totalorder %s21, 0
      // Predicated region
      $region33: #{resnet3modal_forward.2} parent=31 // pred_check
        %p1028 = pneg %p1027
      $region34: #{resnet3modal_forward.2} parent=31 // pred_check_branch
        %1030 = sbr.rel (%p1028) target = $region36
      $region35: #{resnet3modal_forward.2} parent=31 // pred_region
        %vm1033 = vcmask 1041409
        %v1034 = vsel %vm1033, %v1026, %v989
        %1036 = vst [vmem:[#allocation2] sm:$0x3] %v1034
      $region36: #{resnet3modal_forward.2} parent=31 // pred_fallthru
        _
      %p1037 = scmp.gt.s32.totalorder %s21, 0
      // Predicated region
      $region37: #{resnet3modal_forward.2} parent=31 // pred_check
        %p1038 = pneg %p1037
      $region38: #{resnet3modal_forward.2} parent=31 // pred_check_branch
        %1040 = sbr.rel (%p1038) target = $region40
      $region39: #{resnet3modal_forward.2} parent=31 // pred_region
        %v1041 = vld [vmem:[#allocation2] sm:$0x3]
        %vm1044 = vcmask 1041409
        %v1045 = vsel %vm1044, %v1026, %v989
        %v1047 = vadd.f32 %v1041, %v1045
        %1048 = vst [vmem:[#allocation2] sm:$0x3] %v1047
      $region40: #{resnet3modal_forward.2} parent=31 // pred_fallthru
        _
      // Predicated region
      $region41: #{resnet3modal_forward.2} parent=31 // pred_check
        %p1049 = pneg %p1027
      $region42: #{resnet3modal_forward.2} parent=31 // pred_check_branch
        %1051 = sbr.rel (%p1049) target = $region44
      $region43: #{resnet3modal_forward.2} parent=31 // pred_region
        %v1052 = vld [vmem:[#allocation2] sm:$0x3]
        %v1053 = vmul.f32 %v1052, 0.00390625
        %v1054 = vpack.c.bf16 %v1053, %v1053
        %1055 = vst [vmem:[%s254] sm:$0x1] %v1054
      $region44: #{resnet3modal_forward.2} parent=31 // pred_fallthru
        _
      %p1056 = scmp.lt.s32.totalorder %s19, 2
      %s1057 = scalar_select %p1056, %s19, 2
      %s1058 = scalar_lea.vmem %s3, %s1057
      // Predicated region
      $region45: #{resnet3modal_forward.2} parent=31 // pred_check
        %p1059 = pneg %p133
      $region46: #{resnet3modal_forward.2} parent=31 // pred_check_branch
        %1061 = sbr.rel (%p1059) target = $region48
      $region47: #{resnet3modal_forward.2} parent=31 // pred_region
        _
      $region48: #{resnet3modal_forward.2} parent=31 // pred_fallthru
        _
    $region32: #{resnet3modal_forward.2} parent=5 // pred_fallthru
      _
    %p1062 = scmp.le.s32.totalorder 2, %s9
    // Predicated region
    $region49: #{resnet3modal_forward.2} parent=5 // pred_check
      %p1063 = pneg %p1062
    $region50: #{resnet3modal_forward.2} parent=5 // pred_check_branch
      %1065 = sbr.rel (%p1063) target = $region52
    $region51: #{resnet3modal_forward.2} parent=5 // pred_region
      %s1066 = ssub.s32 %s9, 2
      // Predicated region
      $region53: #{resnet3modal_forward.2} parent=51 // pred_check
        %p1067 = pneg %p139
      $region54: #{resnet3modal_forward.2} parent=51 // pred_check_branch
        %1069 = sbr.rel (%p1067) target = $region56
      $region55: #{resnet3modal_forward.2} parent=51 // pred_region
        %p1070 = scmp.lt.s32.totalorder %s22, 2
        %s1071 = scalar_select %p1070, %s22, 2
        %s1072 = scalar_lea.vmem %s3, %s1071
      $region56: #{resnet3modal_forward.2} parent=51 // pred_fallthru
        _
    $region52: #{resnet3modal_forward.2} parent=5 // pred_fallthru
      _
  $region6: #{resnet3modal_forward.2} parent=0 // loop_footer
    %s13 = sadd.s32 1, %s9
  $region7: #{resnet3modal_forward.2} parent=0 // loop_footer_branch
    %8 = sbr.rel target = $region3
  $region8: #{resnet3modal_forward.2} parent=0 // loop_exit
    _

// kernel: resnet3modal_forward.3
$region0: #{resnet3modal_forward.3}
  #allocation0 [shape = 'u32[]', space=smem, size = 0x4, offset = 0x4, fixed_abs, tag = 'smem constant byte address 0x4 - core index']
  #allocation1 [shape = 'u32[144,128]{1,0:T(1,128)}', space=vmem, size = 0x12000, scoped, tag = 'internal scratch']
  %s0 = inlined_call_operand.vmem [shape: bf16[3,2,128], index: 0, kind: input, shape index: {}]
  %s1 = inlined_call_operand.vmem [shape: bf16[3,128,512], index: 1, kind: input, shape index: {}]
  %s2 = inlined_call_operand.vmem [shape: f32[3,1,512], index: 2, kind: input, shape index: {}]
  %s3 = inlined_call_operand.vmem [shape: bf16[3,512,256], index: 3, kind: input, shape index: {}]
  %s4 = inlined_call_operand.vmem [shape: f32[3,1,128], index: 4, kind: input, shape index: {}]
  %s5 = inlined_call_operand.vmem [shape: f32[1,128], index: 5, kind: input, shape index: {}]
  %s6 = inlined_call_operand.hbm [shape: bf16[3,2,512], index: 6, kind: output, shape index: {0}]
  %s7 = inlined_call_operand.vmem [shape: f32[3,2,128], index: 7, kind: output, shape index: {1}]
  %s8 = inlined_call_operand.hbm [shape: f32[2,128], index: 8, kind: output, shape index: {2}]
  %9 = xla_tuple %s6, %s7, %s8
  %s10 = sld [smem:[#allocation0]]
  $region81: #{resnet3modal_forward.3} parent=0
    _
  %s12 = ssub.s32 1, %s10
  %s13 = scalar_select 0, %s12, %s10
  $region1: #{resnet3modal_forward.3} parent=0
    #allocation2 [shape = 'u8[4096]{0}', space=vmem, size = 0x1000, scoped, tag = 'output window, operand 0']
    #allocation3 [shape = 's32[2]{0}', space=sflag, size = 0x8, scoped, tag = 'scoped memory for resnet3modal_forward.3']
    #allocation4 [shape = 'u8[1024]{0}', space=vmem, size = 0x400, scoped, tag = 'output window, operand 2, single buffered']
    #allocation5 [shape = 's32[1]{0}', space=sflag, size = 0x4, scoped, tag = 'scoped memory for resnet3modal_forward.3']
    %14 = vsyncpa [#allocation3], 0
    %s15 = scalar_lea.sflag [#allocation3], 1
    %16 = vsyncpa %s15, 0
    %17 = vsyncpa [#allocation5], 0
    loop: start=0, step=1, limit=5
    $region2: #{resnet3modal_forward.3} parent=1 // loop_pre_header
      _
    $region3: #{resnet3modal_forward.3} parent=1 // loop_header
      %s19 = sphi 0, %s23
      %p20 = scmp.ge.s32.totalorder %s19, 5
      %s26 = sphi 0, %s38
      %s27 = sphi 0, %s34
      %s28 = sphi 0, %s26
      %s29 = sphi 0, %s27
      %s30 = sphi 0, %s28
      %s31 = sphi 0, %s29
      %s43 = sphi 0, %s45
      %s46 = sphi 0, %s43
      %s47 = sphi 0, %s46
      %s63 = sphi 0, %s47
      %s69 = sphi 0, %s71
      %s72 = sphi 0, %s69
      %s73 = sphi 0, %s72
      %s89 = sphi 0, %s73
      %s95 = sphi 0, %s97
      %s98 = sphi 0, %s95
      %s99 = sphi 0, %s98
      %s115 = sphi 0, %s99
      %s121 = sphi 0, %s123
      %s124 = sphi 0, %s121
      %s125 = sphi 0, %s124
      %s141 = sphi 0, %s125
      %s147 = sphi 0, %s149
      %s150 = sphi 0, %s147
      %s151 = sphi 0, %s150
      %s167 = sphi 0, %s151
      %s171 = sphi 0, %s171
      %s173 = sphi 0, %s171
      %s174 = sphi 0, %s173
      %s188 = sphi 0, %s174
      %s196 = sphi 0, %s198
      %s199 = sphi 0, %s196
      %s200 = sphi 0, %s199
      %s216 = sphi 0, %s200
      %s224 = sphi 0, %s226
      %s227 = sphi 0, %s224
      %s228 = sphi 0, %s227
      %s244 = sphi 0, %s228
      %s250 = sphi 0, %s252
      %s253 = sphi 0, %s250
      %s254 = sphi 0, %s253
      %s270 = sphi 0, %s254
    $region4: #{resnet3modal_forward.3} parent=1 // loop_header_branch
      %22 = sbr.rel (%p20) target = $region8
    $region5: #{resnet3modal_forward.3} parent=1 // loop_body
      %s24 = ssub.s32 %s19, 1
      %s25 = ssub.s32 %s19, 2
      %s32 = sadd.s32 1, %s27
      %p33 = scmp.ge.s32.totalorder %s32, 3
      %s34 = scalar_select %p33, 0, %s32
      %s35 = sadd.s32 1, %s26
      %s36 = scalar_select %p33, %s35, %s26
      %p37 = scmp.ge.s32.totalorder %s36, 1
      %s38 = scalar_select %p37, 0, %s36
      %s39 = ssub.s32 %s27, %s34
      %s40 = ssub.s32 %s26, %s38
      %s41 = sor.u32 %s39, %s40
      %p42 = scmp.eq.s32.totalorder %s41, 0
      %s44 = sadd.s32 %s43, 1
      %s45 = scalar_select %p42, %s43, %s44
      %p48 = pneg %p42
      %p49 = scmp.eq.s32.totalorder %s19, 2
      %p50 = por %p48, %p49
      %p51 = scmp.ne.s32.totalorder %s43, %s46
      %p52 = scmp.eq.s32.totalorder %s19, 0
      %p53 = por %p51, %p52
      %p54 = scmp.ne.s32.totalorder %s43, %s46
      %p55 = scmp.eq.s32.totalorder %s24, 2
      %p56 = por %p54, %p55
      %p57 = scmp.ne.s32.totalorder %s46, %s47
      %p58 = scmp.eq.s32.totalorder %s24, 0
      %p59 = por %p57, %p58
      %p60 = scmp.ne.s32.totalorder %s46, %s47
      %p61 = scmp.eq.s32.totalorder %s25, 2
      %p62 = por %p60, %p61
      %p64 = scmp.ne.s32.totalorder %s47, %s63
      %p65 = scmp.eq.s32.totalorder %s25, 0
      %p66 = por %p64, %p65
      %s67 = ssub.s32 %s27, %s34
      %p68 = scmp.eq.s32.totalorder %s67, 0
      %s70 = sadd.s32 %s69, 1
      %s71 = scalar_select %p68, %s69, %s70
      %p74 = pneg %p68
      %p75 = scmp.eq.s32.totalorder %s19, 2
      %p76 = por %p74, %p75
      %p77 = scmp.ne.s32.totalorder %s69, %s72
      %p78 = scmp.eq.s32.totalorder %s19, 0
      %p79 = por %p77, %p78
      %p80 = scmp.ne.s32.totalorder %s69, %s72
      %p81 = scmp.eq.s32.totalorder %s24, 2
      %p82 = por %p80, %p81
      %p83 = scmp.ne.s32.totalorder %s72, %s73
      %p84 = scmp.eq.s32.totalorder %s24, 0
      %p85 = por %p83, %p84
      %p86 = scmp.ne.s32.totalorder %s72, %s73
      %p87 = scmp.eq.s32.totalorder %s25, 2
      %p88 = por %p86, %p87
      %p90 = scmp.ne.s32.totalorder %s73, %s89
      %p91 = scmp.eq.s32.totalorder %s25, 0
      %p92 = por %p90, %p91
      %s93 = ssub.s32 %s27, %s34
      %p94 = scmp.eq.s32.totalorder %s93, 0
      %s96 = sadd.s32 %s95, 1
      %s97 = scalar_select %p94, %s95, %s96
      %p100 = pneg %p94
      %p101 = scmp.eq.s32.totalorder %s19, 2
      %p102 = por %p100, %p101
      %p103 = scmp.ne.s32.totalorder %s95, %s98
      %p104 = scmp.eq.s32.totalorder %s19, 0
      %p105 = por %p103, %p104
      %p106 = scmp.ne.s32.totalorder %s95, %s98
      %p107 = scmp.eq.s32.totalorder %s24, 2
      %p108 = por %p106, %p107
      %p109 = scmp.ne.s32.totalorder %s98, %s99
      %p110 = scmp.eq.s32.totalorder %s24, 0
      %p111 = por %p109, %p110
      %p112 = scmp.ne.s32.totalorder %s98, %s99
      %p113 = scmp.eq.s32.totalorder %s25, 2
      %p114 = por %p112, %p113
      %p116 = scmp.ne.s32.totalorder %s99, %s115
      %p117 = scmp.eq.s32.totalorder %s25, 0
      %p118 = por %p116, %p117
      %s119 = ssub.s32 %s27, %s34
      %p120 = scmp.eq.s32.totalorder %s119, 0
      %s122 = sadd.s32 %s121, 1
      %s123 = scalar_select %p120, %s121, %s122
      %p126 = pneg %p120
      %p127 = scmp.eq.s32.totalorder %s19, 2
      %p128 = por %p126, %p127
      %p129 = scmp.ne.s32.totalorder %s121, %s124
      %p130 = scmp.eq.s32.totalorder %s19, 0
      %p131 = por %p129, %p130
      %p132 = scmp.ne.s32.totalorder %s121, %s124
      %p133 = scmp.eq.s32.totalorder %s24, 2
      %p134 = por %p132, %p133
      %p135 = scmp.ne.s32.totalorder %s124, %s125
      %p136 = scmp.eq.s32.totalorder %s24, 0
      %p137 = por %p135, %p136
      %p138 = scmp.ne.s32.totalorder %s124, %s125
      %p139 = scmp.eq.s32.totalorder %s25, 2
      %p140 = por %p138, %p139
      %p142 = scmp.ne.s32.totalorder %s125, %s141
      %p143 = scmp.eq.s32.totalorder %s25, 0
      %p144 = por %p142, %p143
      %s145 = ssub.s32 %s27, %s34
      %p146 = scmp.eq.s32.totalorder %s145, 0
      %s148 = sadd.s32 %s147, 1
      %s149 = scalar_select %p146, %s147, %s148
      %p152 = pneg %p146
      %p153 = scmp.eq.s32.totalorder %s19, 2
      %p154 = por %p152, %p153
      %p155 = scmp.ne.s32.totalorder %s147, %s150
      %p156 = scmp.eq.s32.totalorder %s19, 0
      %p157 = por %p155, %p156
      %p158 = scmp.ne.s32.totalorder %s147, %s150
      %p159 = scmp.eq.s32.totalorder %s24, 2
      %p160 = por %p158, %p159
      %p161 = scmp.ne.s32.totalorder %s150, %s151
      %p162 = scmp.eq.s32.totalorder %s24, 0
      %p163 = por %p161, %p162
      %p164 = scmp.ne.s32.totalorder %s150, %s151
      %p165 = scmp.eq.s32.totalorder %s25, 2
      %p166 = por %p164, %p165
      %p168 = scmp.ne.s32.totalorder %s151, %s167
      %p169 = scmp.eq.s32.totalorder %s25, 0
      %p170 = por %p168, %p169
      %s172 = sadd.s32 %s171, 1
      %p175 = scmp.eq.s32.totalorder %s19, 2
      %p176 = scmp.ne.s32.totalorder %s171, %s173
      %p177 = scmp.eq.s32.totalorder %s19, 0
      %p178 = por %p176, %p177
      %p179 = scmp.ne.s32.totalorder %s171, %s173
      %p180 = scmp.eq.s32.totalorder %s24, 2
      %p181 = por %p179, %p180
      %p182 = scmp.ne.s32.totalorder %s173, %s174
      %p183 = scmp.eq.s32.totalorder %s24, 0
      %p184 = por %p182, %p183
      %p185 = scmp.ne.s32.totalorder %s173, %s174
      %p186 = scmp.eq.s32.totalorder %s25, 2
      %p187 = por %p185, %p186
      %p189 = scmp.ne.s32.totalorder %s174, %s188
      %p190 = scmp.eq.s32.totalorder %s25, 0
      %p191 = por %p189, %p190
      %s192 = ssub.s32 %s27, %s34
      %s193 = ssub.s32 %s26, %s38
      %s194 = sor.u32 %s192, %s193
      %p195 = scmp.eq.s32.totalorder %s194, 0
      %s197 = sadd.s32 %s196, 1
      %s198 = scalar_select %p195, %s196, %s197
      %p201 = pneg %p195
      %p202 = scmp.eq.s32.totalorder %s19, 2
      %p203 = por %p201, %p202
      %p204 = scmp.ne.s32.totalorder %s196, %s199
      %p205 = scmp.eq.s32.totalorder %s19, 0
      %p206 = por %p204, %p205
      %p207 = scmp.ne.s32.totalorder %s196, %s199
      %p208 = scmp.eq.s32.totalorder %s24, 2
      %p209 = por %p207, %p208
      %p210 = scmp.ne.s32.totalorder %s199, %s200
      %p211 = scmp.eq.s32.totalorder %s24, 0
      %p212 = por %p210, %p211
      %p213 = scmp.ne.s32.totalorder %s199, %s200
      %p214 = scmp.eq.s32.totalorder %s25, 2
      %p215 = por %p213, %p214
      %p217 = scmp.ne.s32.totalorder %s200, %s216
      %p218 = scmp.eq.s32.totalorder %s25, 0
      %p219 = por %p217, %p218
      %s220 = ssub.s32 %s27, %s34
      %s221 = ssub.s32 %s26, %s38
      %s222 = sor.u32 %s220, %s221
      %p223 = scmp.eq.s32.totalorder %s222, 0
      %s225 = sadd.s32 %s224, 1
      %s226 = scalar_select %p223, %s224, %s225
      %p229 = pneg %p223
      %p230 = scmp.eq.s32.totalorder %s19, 2
      %p231 = por %p229, %p230
      %p232 = scmp.ne.s32.totalorder %s224, %s227
      %p233 = scmp.eq.s32.totalorder %s19, 0
      %p234 = por %p232, %p233
      %p235 = scmp.ne.s32.totalorder %s224, %s227
      %p236 = scmp.eq.s32.totalorder %s24, 2
      %p237 = por %p235, %p236
      %p238 = scmp.ne.s32.totalorder %s227, %s228
      %p239 = scmp.eq.s32.totalorder %s24, 0
      %p240 = por %p238, %p239
      %p241 = scmp.ne.s32.totalorder %s227, %s228
      %p242 = scmp.eq.s32.totalorder %s25, 2
      %p243 = por %p241, %p242
      %p245 = scmp.ne.s32.totalorder %s228, %s244
      %p246 = scmp.eq.s32.totalorder %s25, 0
      %p247 = por %p245, %p246
      %s248 = ssub.s32 %s26, %s38
      %p249 = scmp.eq.s32.totalorder %s248, 0
      %s251 = sadd.s32 %s250, 1
      %s252 = scalar_select %p249, %s250, %s251
      %p255 = pneg %p249
      %p256 = scmp.eq.s32.totalorder %s19, 2
      %p257 = por %p255, %p256
      %p258 = scmp.ne.s32.totalorder %s250, %s253
      %p259 = scmp.eq.s32.totalorder %s19, 0
      %p260 = por %p258, %p259
      %p261 = scmp.ne.s32.totalorder %s250, %s253
      %p262 = scmp.eq.s32.totalorder %s24, 2
      %p263 = por %p261, %p262
      %p264 = scmp.ne.s32.totalorder %s253, %s254
      %p265 = scmp.eq.s32.totalorder %s24, 0
      %p266 = por %p264, %p265
      %p267 = scmp.ne.s32.totalorder %s253, %s254
      %p268 = scmp.eq.s32.totalorder %s25, 2
      %p269 = por %p267, %p268
      %p271 = scmp.ne.s32.totalorder %s254, %s270
      %p272 = scmp.eq.s32.totalorder %s25, 0
      %p273 = por %p271, %p272
      %p274 = scmp.le.s32.totalorder 1, %s19
      %p275 = scmp.lt.s32.totalorder %s19, 4
      %p276 = pnand %p274, %p275
      %p277 = pneg %p276
      // Predicated region
      $region9: #{resnet3modal_forward.3} parent=5 // pred_check
        _
      $region10: #{resnet3modal_forward.3} parent=5 // pred_check_branch
        %279 = sbr.rel (%p276) target = $region12
      $region11: #{resnet3modal_forward.3} parent=5 // pred_region
        %s280 = ssub.s32 %s19, 1
        // Predicated region
        $region13: #{resnet3modal_forward.3} parent=11 // pred_check
          %p281 = pneg %p184
        $region14: #{resnet3modal_forward.3} parent=11 // pred_check_branch
          %283 = sbr.rel (%p281) target = $region16
        $region15: #{resnet3modal_forward.3} parent=11 // pred_region
          _
        $region16: #{resnet3modal_forward.3} parent=11 // pred_fallthru
          _
      $region12: #{resnet3modal_forward.3} parent=5 // pred_fallthru
        _
      %p284 = scmp.lt.s32.totalorder %s19, 3
      // Predicated region
      $region17: #{resnet3modal_forward.3} parent=5 // pred_check
        %p285 = pneg %p284
      $region18: #{resnet3modal_forward.3} parent=5 // pred_check_branch
        %287 = sbr.rel (%p285) target = $region20
      $region19: #{resnet3modal_forward.3} parent=5 // pred_region
        // Predicated region
        $region21: #{resnet3modal_forward.3} parent=19 // pred_check
          %p288 = pneg %p53
        $region22: #{resnet3modal_forward.3} parent=19 // pred_check_branch
          %290 = sbr.rel (%p288) target = $region24
        $region23: #{resnet3modal_forward.3} parent=19 // pred_region
          %p291 = scmp.lt.s32.totalorder %s27, 2
          %s292 = scalar_select %p291, %s27, 2
          %p293 = scmp.lt.s32.totalorder %s26, 0
          %s294 = scalar_select %p293, %s26, 0
          %s295 = sadd.s32 %s294, %s292
          %s296 = scalar_lea.vmem %s0, %s295
        $region24: #{resnet3modal_forward.3} parent=19 // pred_fallthru
          _
        // Predicated region
        $region25: #{resnet3modal_forward.3} parent=19 // pred_check
          %p297 = pneg %p79
        $region26: #{resnet3modal_forward.3} parent=19 // pred_check_branch
          %299 = sbr.rel (%p297) target = $region28
        $region27: #{resnet3modal_forward.3} parent=19 // pred_region
          %p300 = scmp.lt.s32.totalorder %s27, 2
          %s301 = scalar_select %p300, %s27, 2
          %s302 = smul.addr %s301, 64
          %s303 = smul.addr %s302, 4
          %s304 = scalar_lea.vmem %s1, %s303
        $region28: #{resnet3modal_forward.3} parent=19 // pred_fallthru
          _
        // Predicated region
        $region29: #{resnet3modal_forward.3} parent=19 // pred_check
          %p305 = pneg %p105
        $region30: #{resnet3modal_forward.3} parent=19 // pred_check_branch
          %307 = sbr.rel (%p305) target = $region32
        $region31: #{resnet3modal_forward.3} parent=19 // pred_region
          %p308 = scmp.lt.s32.totalorder %s27, 2
          %s309 = scalar_select %p308, %s27, 2
          %s310 = smul.addr %s309, 4
          %s311 = scalar_lea.vmem %s2, %s310
        $region32: #{resnet3modal_forward.3} parent=19 // pred_fallthru
          _
        // Predicated region
        $region33: #{resnet3modal_forward.3} parent=19 // pred_check
          %p312 = pneg %p131
        $region34: #{resnet3modal_forward.3} parent=19 // pred_check_branch
          %314 = sbr.rel (%p312) target = $region36
        $region35: #{resnet3modal_forward.3} parent=19 // pred_region
          %p315 = scmp.lt.s32.totalorder %s27, 2
          %s316 = scalar_select %p315, %s27, 2
          %s317 = smul.addr %s316, 128
          %s318 = smul.addr %s317, 4
          %s319 = scalar_lea.vmem %s3, %s318
        $region36: #{resnet3modal_forward.3} parent=19 // pred_fallthru
          _
        // Predicated region
        $region37: #{resnet3modal_forward.3} parent=19 // pred_check
          %p320 = pneg %p157
        $region38: #{resnet3modal_forward.3} parent=19 // pred_check_branch
          %322 = sbr.rel (%p320) target = $region40
        $region39: #{resnet3modal_forward.3} parent=19 // pred_region
          %p323 = scmp.lt.s32.totalorder %s27, 2
          %s324 = scalar_select %p323, %s27, 2
          %s325 = scalar_lea.vmem %s4, %s324
        $region40: #{resnet3modal_forward.3} parent=19 // pred_fallthru
          _
      $region20: #{resnet3modal_forward.3} parent=5 // pred_fallthru
        _
      %p326 = scmp.le.s32.totalorder 1, %s19
      %p327 = scmp.lt.s32.totalorder %s19, 4
      %p328 = pnand %p326, %p327
      %p329 = pneg %p328
      // Predicated region
      $region41: #{resnet3modal_forward.3} parent=5 // pred_check
        _
      $region42: #{resnet3modal_forward.3} parent=5 // pred_check_branch
        %331 = sbr.rel (%p328) target = $region44
      $region43: #{resnet3modal_forward.3} parent=5 // pred_region
        %s332 = ssub.s32 %s19, 1
        %p333 = scmp.lt.s32.totalorder %s29, 2
        %s334 = scalar_select %p333, %s29, 2
        %p335 = scmp.lt.s32.totalorder %s28, 0
        %s336 = scalar_select %p335, %s28, 0
        %s337 = sadd.s32 %s336, %s334
        %s338 = scalar_lea.vmem %s0, %s337
        %p339 = pneg %p59
        %p340 = pneg %p56
        %p341 = scmp.lt.s32.totalorder %s29, 2
        %s342 = scalar_select %p341, %s29, 2
        %s343 = smul.addr %s342, 64
        %s344 = smul.addr %s343, 4
        %s345 = scalar_lea.vmem %s1, %s344
        %p346 = pneg %p85
        %p347 = pneg %p82
        %p348 = scmp.lt.s32.totalorder %s29, 2
        %s349 = scalar_select %p348, %s29, 2
        %s350 = smul.addr %s349, 4
        %s351 = scalar_lea.vmem %s2, %s350
        %p352 = pneg %p111
        %p353 = pneg %p108
        %p354 = scmp.lt.s32.totalorder %s29, 2
        %s355 = scalar_select %p354, %s29, 2
        %s356 = smul.addr %s355, 128
        %s357 = smul.addr %s356, 4
        %s358 = scalar_lea.vmem %s3, %s357
        %p359 = pneg %p137
        %p360 = pneg %p134
        %p361 = scmp.lt.s32.totalorder %s29, 2
        %s362 = scalar_select %p361, %s29, 2
        %s363 = scalar_lea.vmem %s4, %s362
        %p364 = pneg %p163
        %p365 = pneg %p160
        %p366 = pneg %p184
        %p367 = pneg %p181
        %p368 = pneg %p212
        %p369 = pneg %p209
        %s370 = sand.u32 %s199, 1
        %s371 = scalar_lea.sflag [#allocation3], %s370
        %s372 = sand.u32 %s199, 1
        %s373 = smul.addr %s372, 4
        %s374 = scalar_lea.vmem [#allocation2], %s373
        %p375 = pneg %p240
        %p376 = pneg %p237
        %p377 = scmp.lt.s32.totalorder %s29, 2
        %s378 = scalar_select %p377, %s29, 2
        %p379 = scmp.lt.s32.totalorder %s28, 0
        %s380 = scalar_select %p379, %s28, 0
        %s381 = sadd.s32 %s380, %s378
        %s382 = smul.addr %s381, 2
        %s383 = scalar_lea.vmem %s7, %s382
        %p384 = pneg %p266
        %p385 = pneg %p263
        %p386 = scmp.lt.s32.totalorder %s29, 2
        %s387 = scalar_select %p386, %s29, 2
        %p388 = scmp.lt.s32.totalorder %s28, 0
        %s389 = scalar_select %p388, %s28, 0
        %s390 = sadd.s32 %s389, %s387
        %s391 = scalar_lea.vmem %s0, %s390
        %p392 = scmp.lt.s32.totalorder %s29, 2
        %s393 = scalar_select %p392, %s29, 2
        %s394 = smul.addr %s393, 64
        %s395 = smul.addr %s394, 4
        %s396 = scalar_lea.vmem %s1, %s395
        %p397 = scmp.lt.s32.totalorder %s29, 2
        %s398 = scalar_select %p397, %s29, 2
        %s399 = smul.addr %s398, 4
        %s400 = scalar_lea.vmem %s2, %s399
        %p401 = scmp.lt.s32.totalorder %s29, 2
        %s402 = scalar_select %p401, %s29, 2
        %s403 = smul.addr %s402, 128
        %s404 = smul.addr %s403, 4
        %s405 = scalar_lea.vmem %s3, %s404
        %p406 = scmp.lt.s32.totalorder %s29, 2
        %s407 = scalar_select %p406, %s29, 2
        %s408 = scalar_lea.vmem %s4, %s407
        %p409 = scmp.lt.s32.totalorder %s29, 2
        %s410 = scalar_select %p409, %s29, 2
        %p411 = scmp.lt.s32.totalorder %s28, 0
        %s412 = scalar_select %p411, %s28, 0
        %s413 = sadd.s32 %s412, %s410
        %s414 = smul.addr %s413, 2
        %s415 = scalar_lea.vmem %s7, %s414
        %v417 = vld [vmem:[%s391] sm:$0x1]
        %v418 = vld [vmem:[%s396] sm:$0xff]
        %v419 = vld [vmem:[%s396 + $0x8] sm:$0xff]
        %v420 = vld [vmem:[%s396 + $0x10] sm:$0xff]
        %v421 = vld [vmem:[%s396 + $0x18] sm:$0xff]
        %v422 = vld [vmem:[%s396 + $0x20] sm:$0xff]
        %v423 = vld [vmem:[%s396 + $0x28] sm:$0xff]
        %v424 = vld [vmem:[%s396 + $0x30] sm:$0xff]
        %v425 = vld [vmem:[%s396 + $0x38] sm:$0xff]
        %v426 = vld [vmem:[%s396 + $0x40] sm:$0xff]
        %v427 = vld [vmem:[%s396 + $0x48] sm:$0xff]
        %v428 = vld [vmem:[%s396 + $0x50] sm:$0xff]
        %v429 = vld [vmem:[%s396 + $0x58] sm:$0xff]
        %v430 = vld [vmem:[%s396 + $0x60] sm:$0xff]
        %v431 = vld [vmem:[%s396 + $0x68] sm:$0xff]
        %v432 = vld [vmem:[%s396 + $0x70] sm:$0xff]
        %v433 = vld [vmem:[%s396 + $0x78] sm:$0xff]
        %v434 = vld [vmem:[%s396 + $0x80] sm:$0xff]
        %v435 = vld [vmem:[%s396 + $0x88] sm:$0xff]
        %v436 = vld [vmem:[%s396 + $0x90] sm:$0xff]
        %v437 = vld [vmem:[%s396 + $0x98] sm:$0xff]
        %v438 = vld [vmem:[%s396 + $0xa0] sm:$0xff]
        %v439 = vld [vmem:[%s396 + $0xa8] sm:$0xff]
        %v440 = vld [vmem:[%s396 + $0xb0] sm:$0xff]
        %v441 = vld [vmem:[%s396 + $0xb8] sm:$0xff]
        %v442 = vld [vmem:[%s396 + $0xc0] sm:$0xff]
        %v443 = vld [vmem:[%s396 + $0xc8] sm:$0xff]
        %v444 = vld [vmem:[%s396 + $0xd0] sm:$0xff]
        %v445 = vld [vmem:[%s396 + $0xd8] sm:$0xff]
        %v446 = vld [vmem:[%s396 + $0xe0] sm:$0xff]
        %v447 = vld [vmem:[%s396 + $0xe8] sm:$0xff]
        %v448 = vld [vmem:[%s396 + $0xf0] sm:$0xff]
        %v449 = vld [vmem:[%s396 + $0xf8] sm:$0xff]
        %v450 = vld [vmem:[%s400] sm:$0xf]
        %v452 = vlaneseq
        %v453 = vshrl.u32 %v452, 7
        %v454 = vsub.s32 0, %v453
        %v455 = vrot.slane %v450, %v454
        %v456 = vlaneseq
        %v457 = vshrl.u32 %v456, 7
        %v458 = vsub.s32 1, %v457
        %v459 = vrot.slane %v450, %v458
        %v460 = vlaneseq
        %v461 = vshrl.u32 %v460, 7
        %v462 = vsub.s32 2, %v461
        %v463 = vrot.slane %v450, %v462
        %v464 = vlaneseq
        %v465 = vshrl.u32 %v464, 7
        %v466 = vsub.s32 3, %v465
        %v467 = vrot.slane %v450, %v466
        %v504 = vunpack.c.l.b16 %v418
        %v505 = vunpack.c.h.b16 %v418
        %v506 = vunpack.c.l.b16 %v419
        %v507 = vunpack.c.h.b16 %v419
        %v508 = vunpack.c.l.b16 %v420
        %v509 = vunpack.c.h.b16 %v420
        %v510 = vunpack.c.l.b16 %v421
        %v511 = vunpack.c.h.b16 %v421
        %v512 = vunpack.c.l.b16 %v422
        %v513 = vunpack.c.h.b16 %v422
        %v514 = vunpack.c.l.b16 %v423
        %v515 = vunpack.c.h.b16 %v423
        %v516 = vunpack.c.l.b16 %v424
        %v517 = vunpack.c.h.b16 %v424
        %v518 = vunpack.c.l.b16 %v425
        %v519 = vunpack.c.h.b16 %v425
        %v520 = vunpack.c.l.b16 %v426
        %v521 = vunpack.c.h.b16 %v426
        %v522 = vunpack.c.l.b16 %v427
        %v523 = vunpack.c.h.b16 %v427
        %v524 = vunpack.c.l.b16 %v428
        %v525 = vunpack.c.h.b16 %v428
        %v526 = vunpack.c.l.b16 %v429
        %v527 = vunpack.c.h.b16 %v429
        %v528 = vunpack.c.l.b16 %v430
        %v529 = vunpack.c.h.b16 %v430
        %v530 = vunpack.c.l.b16 %v431
        %v531 = vunpack.c.h.b16 %v431
        %v532 = vunpack.c.l.b16 %v432
        %v533 = vunpack.c.h.b16 %v432
        %v534 = vunpack.c.l.b16 %v433
        %v535 = vunpack.c.h.b16 %v433
        %v536 = vunpack.c.l.b16 %v434
        %v537 = vunpack.c.h.b16 %v434
        %v538 = vunpack.c.l.b16 %v435
        %v539 = vunpack.c.h.b16 %v435
        %v540 = vunpack.c.l.b16 %v436
        %v541 = vunpack.c.h.b16 %v436
        %v542 = vunpack.c.l.b16 %v437
        %v543 = vunpack.c.h.b16 %v437
        %v544 = vunpack.c.l.b16 %v438
        %v545 = vunpack.c.h.b16 %v438
        %v546 = vunpack.c.l.b16 %v439
        %v547 = vunpack.c.h.b16 %v439
        %v548 = vunpack.c.l.b16 %v440
        %v549 = vunpack.c.h.b16 %v440
        %v550 = vunpack.c.l.b16 %v441
        %v551 = vunpack.c.h.b16 %v441
        %v552 = vunpack.c.l.b16 %v442
        %v553 = vunpack.c.h.b16 %v442
        %v554 = vunpack.c.l.b16 %v443
        %v555 = vunpack.c.h.b16 %v443
        %v556 = vunpack.c.l.b16 %v444
        %v557 = vunpack.c.h.b16 %v444
        %v558 = vunpack.c.l.b16 %v445
        %v559 = vunpack.c.h.b16 %v445
        %v560 = vunpack.c.l.b16 %v446
        %v561 = vunpack.c.h.b16 %v446
        %v562 = vunpack.c.l.b16 %v447
        %v563 = vunpack.c.h.b16 %v447
        %v564 = vunpack.c.l.b16 %v448
        %v565 = vunpack.c.h.b16 %v448
        %v566 = vunpack.c.l.b16 %v449
        %v567 = vunpack.c.h.b16 %v449
        %v568 = vpack.c.b16 %v508, %v504
        %v569 = vpack.c.b16 %v509, %v505
        %v570 = vpack.c.b16 %v510, %v506
        %v571 = vpack.c.b16 %v511, %v507
        %v572 = vpack.c.b16 %v516, %v512
        %v573 = vpack.c.b16 %v517, %v513
        %v574 = vpack.c.b16 %v518, %v514
        %v575 = vpack.c.b16 %v519, %v515
        %v576 = vpack.c.b16 %v524, %v520
        %v577 = vpack.c.b16 %v525, %v521
        %v578 = vpack.c.b16 %v526, %v522
        %v579 = vpack.c.b16 %v527, %v523
        %v580 = vpack.c.b16 %v532, %v528
        %v581 = vpack.c.b16 %v533, %v529
        %v582 = vpack.c.b16 %v534, %v530
        %v583 = vpack.c.b16 %v535, %v531
        %v584 = vpack.c.b16 %v540, %v536
        %v585 = vpack.c.b16 %v541, %v537
        %v586 = vpack.c.b16 %v542, %v538
        %v587 = vpack.c.b16 %v543, %v539
        %v588 = vpack.c.b16 %v548, %v544
        %v589 = vpack.c.b16 %v549, %v545
        %v590 = vpack.c.b16 %v550, %v546
        %v591 = vpack.c.b16 %v551, %v547
        %v592 = vpack.c.b16 %v556, %v552
        %v593 = vpack.c.b16 %v557, %v553
        %v594 = vpack.c.b16 %v558, %v554
        %v595 = vpack.c.b16 %v559, %v555
        %v596 = vpack.c.b16 %v564, %v560
        %v597 = vpack.c.b16 %v565, %v561
        %v598 = vpack.c.b16 %v566, %v562
        %v599 = vpack.c.b16 %v567, %v563
        %632 = vmatprep.subr.bf16.mxu0 %v569
        %633 = vmatpush1.bf16.msra.mxu0 %v568
        %634 = vmatprep.subr.bf16.mxu0 %v573
        %635 = vmatpush1.bf16.msra.mxu0 %v572
        %636 = vmatprep.subr.bf16.mxu0 %v577
        %637 = vmatpush1.bf16.msra.mxu0 %v576
        %638 = vmatprep.subr.bf16.mxu0 %v581
        %639 = vmatpush1.bf16.msra.mxu0 %v580
        %640 = vmatprep.subr.bf16.mxu0 %v585
        %641 = vmatpush1.bf16.msra.mxu0 %v584
        %642 = vmatprep.subr.bf16.mxu0 %v589
        %643 = vmatpush1.bf16.msra.mxu0 %v588
        %644 = vmatprep.subr.bf16.mxu0 %v593
        %645 = vmatpush1.bf16.msra.mxu0 %v592
        %646 = vmatprep.subr.bf16.mxu0 %v597
        %647 = vmatpush1.bf16.msra.mxu0 %v596
        %648 = vmatprep.subr.bf16.mxu0 0
        %649 = vmatpush1.bf16.msra.mxu0 0
        %650 = vmatprep.subr.bf16.mxu0 0
        %651 = vmatpush1.bf16.msra.mxu0 0
        %652 = vmatprep.subr.bf16.mxu0 0
        %653 = vmatpush1.bf16.msra.mxu0 0
        %654 = vmatprep.subr.bf16.mxu0 0
        %655 = vmatpush1.bf16.msra.mxu0 0
        %656 = vmatprep.subr.bf16.mxu0 0
        %657 = vmatpush1.bf16.msra.mxu0 0
        %658 = vmatprep.subr.bf16.mxu0 0
        %659 = vmatpush1.bf16.msra.mxu0 0
        %660 = vmatprep.subr.bf16.mxu0 0
        %661 = vmatpush1.bf16.msra.mxu0 0
        %662 = vmatprep.subr.bf16.mxu0 0
        %663 = vmatpush1.bf16.msra.mxu0 0
        %664 = vmatprep.mubr.bf16.mxu0 0
        %665 = vmatmul.mubr.bf16.gmra.mrb[0].mxu0 %v417
        %v666 = vpop.f32.mrb[0].mxu0
        %v667 = vadd.f32 %v455, %v666
        %v668 = vpop.f32.mrb[0].mxu0
        %v669 = vadd.f32 %v459, %v668
        %v670 = vpop.f32.mrb[0].mxu0
        %v671 = vpop.f32.mrb[0].mxu0
        %672 = vdwg.mxu0
        %673 = vmatprep.subr.bf16.mxu0 %v571
        %674 = vmatpush1.bf16.msra.mxu0 %v570
        %675 = vmatprep.subr.bf16.mxu0 %v575
        %676 = vmatpush1.bf16.msra.mxu0 %v574
        %677 = vmatprep.subr.bf16.mxu0 %v579
        %678 = vmatpush1.bf16.msra.mxu0 %v578
        %679 = vmatprep.subr.bf16.mxu0 %v583
        %680 = vmatpush1.bf16.msra.mxu0 %v582
        %681 = vmatprep.subr.bf16.mxu0 %v587
        %682 = vmatpush1.bf16.msra.mxu0 %v586
        %683 = vmatprep.subr.bf16.mxu0 %v591
        %684 = vmatpush1.bf16.msra.mxu0 %v590
        %685 = vmatprep.subr.bf16.mxu0 %v595
        %686 = vmatpush1.bf16.msra.mxu0 %v594
        %687 = vmatprep.subr.bf16.mxu0 %v599
        %688 = vmatpush1.bf16.msra.mxu0 %v598
        %689 = vmatprep.subr.bf16.mxu0 0
        %690 = vmatpush1.bf16.msra.mxu0 0
        %691 = vmatprep.subr.bf16.mxu0 0
        %692 = vmatpush1.bf16.msra.mxu0 0
        %693 = vmatprep.subr.bf16.mxu0 0
        %694 = vmatpush1.bf16.msra.mxu0 0
        %695 = vmatprep.subr.bf16.mxu0 0
        %696 = vmatpush1.bf16.msra.mxu0 0
        %697 = vmatprep.subr.bf16.mxu0 0
        %698 = vmatpush1.bf16.msra.mxu0 0
        %699 = vmatprep.subr.bf16.mxu0 0
        %700 = vmatpush1.bf16.msra.mxu0 0
        %701 = vmatprep.subr.bf16.mxu0 0
        %702 = vmatpush1.bf16.msra.mxu0 0
        %703 = vmatprep.subr.bf16.mxu0 0
        %704 = vmatpush1.bf16.msra.mxu0 0
        %705 = vmatprep.mubr.bf16.mxu0 0
        %706 = vmatmul.mubr.bf16.gmra.mrb[0].mxu0 %v417
        %v707 = vpop.f32.mrb[0].mxu0
        %v708 = vadd.f32 %v463, %v707
        %v709 = vpop.f32.mrb[0].mxu0
        %v710 = vadd.f32 %v467, %v709
        %v711 = vpop.f32.mrb[0].mxu0
        %v712 = vpop.f32.mrb[0].mxu0
        %713 = vdwg.mxu0
        %v714 = vmax.f32 %v667, 0.0
        %v715 = vmax.f32 %v669, 0.0
        %v716 = vmax.f32 %v708, 0.0
        %v717 = vmax.f32 %v710, 0.0
        %v718 = vpack.c.bf16 %v714, %v714
        %v719 = vpack.c.bf16 %v715, %v715
        %v720 = vpack.c.bf16 %v716, %v716
        %v721 = vpack.c.bf16 %v717, %v717
        %v726 = vcombine.low %v718, %v719
        %v727 = vcombine.low %v720, %v721
        %v729 = vunpack.c.l.s4 1966171168
        %v730 = vunpack.c.0.s8 %v729
        %v731 = vlaneseq
        %v732 = vshrl.u32 %v731, 7
        %v733 = vsub.s32 %v730, %v732
        %v734 = vrot.slane %v726, %v733
        %v736 = vunpack.c.l.s4 1966171168
        %v737 = vunpack.c.0.s8 %v736
        %v738 = vlaneseq
        %v739 = vshrl.u32 %v738, 7
        %v740 = vsub.s32 %v737, %v739
        %v741 = vrot.slane %v727, %v740
        %v742 = vcombine.low %v734, %v741
        %v744 = vunpack.c.l.s4 1966171168
        %v745 = vunpack.c.0.s8 %v744
        %v746 = vlaneseq
        %v747 = vshrl.u32 %v746, 7
        %v748 = vsub.s32 %v745, %v747
        %v749 = vrot.slane %v742, %v748
        %751 = vst [vmem:[%s374] sm:$0xf] %v749
        %v752 = vld [vmem:[%s405] sm:$0xff]
        %v753 = vld [vmem:[%s405 + $0x8] sm:$0xff]
        %v754 = vld [vmem:[%s405 + $0x10] sm:$0xff]
        %v755 = vld [vmem:[%s405 + $0x18] sm:$0xff]
        %v756 = vld [vmem:[%s405 + $0x20] sm:$0xff]
        %v757 = vld [vmem:[%s405 + $0x28] sm:$0xff]
        %v758 = vld [vmem:[%s405 + $0x30] sm:$0xff]
        %v759 = vld [vmem:[%s405 + $0x38] sm:$0xff]
        %v760 = vld [vmem:[%s405 + $0x40] sm:$0xff]
        %v761 = vld [vmem:[%s405 + $0x48] sm:$0xff]
        %v762 = vld [vmem:[%s405 + $0x50] sm:$0xff]
        %v763 = vld [vmem:[%s405 + $0x58] sm:$0xff]
        %v764 = vld [vmem:[%s405 + $0x60] sm:$0xff]
        %v765 = vld [vmem:[%s405 + $0x68] sm:$0xff]
        %v766 = vld [vmem:[%s405 + $0x70] sm:$0xff]
        %v767 = vld [vmem:[%s405 + $0x78] sm:$0xff]
        %v768 = vld [vmem:[%s405 + $0x80] sm:$0xff]
        %v769 = vld [vmem:[%s405 + $0x88] sm:$0xff]
        %v770 = vld [vmem:[%s405 + $0x90] sm:$0xff]
        %v771 = vld [vmem:[%s405 + $0x98] sm:$0xff]
        %v772 = vld [vmem:[%s405 + $0xa0] sm:$0xff]
        %v773 = vld [vmem:[%s405 + $0xa8] sm:$0xff]
        %v774 = vld [vmem:[%s405 + $0xb0] sm:$0xff]
        %v775 = vld [vmem:[%s405 + $0xb8] sm:$0xff]
        %v776 = vld [vmem:[%s405 + $0xc0] sm:$0xff]
        %v777 = vld [vmem:[%s405 + $0xc8] sm:$0xff]
        %v778 = vld [vmem:[%s405 + $0xd0] sm:$0xff]
        %v779 = vld [vmem:[%s405 + $0xd8] sm:$0xff]
        %v780 = vld [vmem:[%s405 + $0xe0] sm:$0xff]
        %v781 = vld [vmem:[%s405 + $0xe8] sm:$0xff]
        %v782 = vld [vmem:[%s405 + $0xf0] sm:$0xff]
        %v783 = vld [vmem:[%s405 + $0xf8] sm:$0xff]
        %v784 = vld [vmem:[%s405 + $0x100] sm:$0xff]
        %v785 = vld [vmem:[%s405 + $0x108] sm:$0xff]
        %v786 = vld [vmem:[%s405 + $0x110] sm:$0xff]
        %v787 = vld [vmem:[%s405 + $0x118] sm:$0xff]
        %v788 = vld [vmem:[%s405 + $0x120] sm:$0xff]
        %v789 = vld [vmem:[%s405 + $0x128] sm:$0xff]
        %v790 = vld [vmem:[%s405 + $0x130] sm:$0xff]
        %v791 = vld [vmem:[%s405 + $0x138] sm:$0xff]
        %v792 = vld [vmem:[%s405 + $0x140] sm:$0xff]
        %v793 = vld [vmem:[%s405 + $0x148] sm:$0xff]
        %v794 = vld [vmem:[%s405 + $0x150] sm:$0xff]
        %v795 = vld [vmem:[%s405 + $0x158] sm:$0xff]
        %v796 = vld [vmem:[%s405 + $0x160] sm:$0xff]
        %v797 = vld [vmem:[%s405 + $0x168] sm:$0xff]
        %v798 = vld [vmem:[%s405 + $0x170] sm:$0xff]
        %v799 = vld [vmem:[%s405 + $0x178] sm:$0xff]
        %v800 = vld [vmem:[%s405 + $0x180] sm:$0xff]
        %v801 = vld [vmem:[%s405 + $0x188] sm:$0xff]
        %v802 = vld [vmem:[%s405 + $0x190] sm:$0xff]
        %v803 = vld [vmem:[%s405 + $0x198] sm:$0xff]
        %v804 = vld [vmem:[%s405 + $0x1a0] sm:$0xff]
        %v805 = vld [vmem:[%s405 + $0x1a8] sm:$0xff]
        %v806 = vld [vmem:[%s405 + $0x1b0] sm:$0xff]
        %v807 = vld [vmem:[%s405 + $0x1b8] sm:$0xff]
        %v808 = vld [vmem:[%s405 + $0x1c0] sm:$0xff]
        %v809 = vld [vmem:[%s405 + $0x1c8] sm:$0xff]
        %v810 = vld [vmem:[%s405 + $0x1d0] sm:$0xff]
        %v811 = vld [vmem:[%s405 + $0x1d8] sm:$0xff]
        %v812 = vld [vmem:[%s405 + $0x1e0] sm:$0xff]
        %v813 = vld [vmem:[%s405 + $0x1e8] sm:$0xff]
        %v814 = vld [vmem:[%s405 + $0x1f0] sm:$0xff]
        %v815 = vld [vmem:[%s405 + $0x1f8] sm:$0xff]
        %v880 = vunpack.c.l.b16 %v752
        %v881 = vunpack.c.h.b16 %v752
        %v882 = vunpack.c.l.b16 %v753
        %v883 = vunpack.c.h.b16 %v753
        %v884 = vunpack.c.l.b16 %v754
        %v885 = vunpack.c.h.b16 %v754
        %v886 = vunpack.c.l.b16 %v755
        %v887 = vunpack.c.h.b16 %v755
        %v888 = vunpack.c.l.b16 %v756
        %v889 = vunpack.c.h.b16 %v756
        %v890 = vunpack.c.l.b16 %v757
        %v891 = vunpack.c.h.b16 %v757
        %v892 = vunpack.c.l.b16 %v758
        %v893 = vunpack.c.h.b16 %v758
        %v894 = vunpack.c.l.b16 %v759
        %v895 = vunpack.c.h.b16 %v759
        %v896 = vunpack.c.l.b16 %v760
        %v897 = vunpack.c.h.b16 %v760
        %v898 = vunpack.c.l.b16 %v761
        %v899 = vunpack.c.h.b16 %v761
        %v900 = vunpack.c.l.b16 %v762
        %v901 = vunpack.c.h.b16 %v762
        %v902 = vunpack.c.l.b16 %v763
        %v903 = vunpack.c.h.b16 %v763
        %v904 = vunpack.c.l.b16 %v764
        %v905 = vunpack.c.h.b16 %v764
        %v906 = vunpack.c.l.b16 %v765
        %v907 = vunpack.c.h.b16 %v765
        %v908 = vunpack.c.l.b16 %v766
        %v909 = vunpack.c.h.b16 %v766
        %v910 = vunpack.c.l.b16 %v767
        %v911 = vunpack.c.h.b16 %v767
        %v912 = vunpack.c.l.b16 %v768
        %v913 = vunpack.c.h.b16 %v768
        %v914 = vunpack.c.l.b16 %v769
        %v915 = vunpack.c.h.b16 %v769
        %v916 = vunpack.c.l.b16 %v770
        %v917 = vunpack.c.h.b16 %v770
        %v918 = vunpack.c.l.b16 %v771
        %v919 = vunpack.c.h.b16 %v771
        %v920 = vunpack.c.l.b16 %v772
        %v921 = vunpack.c.h.b16 %v772
        %v922 = vunpack.c.l.b16 %v773
        %v923 = vunpack.c.h.b16 %v773
        %v924 = vunpack.c.l.b16 %v774
        %v925 = vunpack.c.h.b16 %v774
        %v926 = vunpack.c.l.b16 %v775
        %v927 = vunpack.c.h.b16 %v775
        %v928 = vunpack.c.l.b16 %v776
        %v929 = vunpack.c.h.b16 %v776
        %v930 = vunpack.c.l.b16 %v777
        %v931 = vunpack.c.h.b16 %v777
        %v932 = vunpack.c.l.b16 %v778
        %v933 = vunpack.c.h.b16 %v778
        %v934 = vunpack.c.l.b16 %v779
        %v935 = vunpack.c.h.b16 %v779
        %v936 = vunpack.c.l.b16 %v780
        %v937 = vunpack.c.h.b16 %v780
        %v938 = vunpack.c.l.b16 %v781
        %v939 = vunpack.c.h.b16 %v781
        %v940 = vunpack.c.l.b16 %v782
        %v941 = vunpack.c.h.b16 %v782
        %v942 = vunpack.c.l.b16 %v783
        %v943 = vunpack.c.h.b16 %v783
        %v944 = vunpack.c.l.b16 %v784
        %v945 = vunpack.c.h.b16 %v784
        %v946 = vunpack.c.l.b16 %v785
        %v947 = vunpack.c.h.b16 %v785
        %v948 = vunpack.c.l.b16 %v786
        %v949 = vunpack.c.h.b16 %v786
        %v950 = vunpack.c.l.b16 %v787
        %v951 = vunpack.c.h.b16 %v787
        %v952 = vunpack.c.l.b16 %v788
        %v953 = vunpack.c.h.b16 %v788
        %v954 = vunpack.c.l.b16 %v789
        %v955 = vunpack.c.h.b16 %v789
        %v956 = vunpack.c.l.b16 %v790
        %v957 = vunpack.c.h.b16 %v790
        %v958 = vunpack.c.l.b16 %v791
        %v959 = vunpack.c.h.b16 %v791
        %v960 = vunpack.c.l.b16 %v792
        %v961 = vunpack.c.h.b16 %v792
        %v962 = vunpack.c.l.b16 %v793
        %v963 = vunpack.c.h.b16 %v793
        %v964 = vunpack.c.l.b16 %v794
        %v965 = vunpack.c.h.b16 %v794
        %v966 = vunpack.c.l.b16 %v795
        %v967 = vunpack.c.h.b16 %v795
        %v968 = vunpack.c.l.b16 %v796
        %v969 = vunpack.c.h.b16 %v796
        %v970 = vunpack.c.l.b16 %v797
        %v971 = vunpack.c.h.b16 %v797
        %v972 = vunpack.c.l.b16 %v798
        %v973 = vunpack.c.h.b16 %v798
        %v974 = vunpack.c.l.b16 %v799
        %v975 = vunpack.c.h.b16 %v799
        %v976 = vunpack.c.l.b16 %v800
        %v977 = vunpack.c.h.b16 %v800
        %v978 = vunpack.c.l.b16 %v801
        %v979 = vunpack.c.h.b16 %v801
        %v980 = vunpack.c.l.b16 %v802
        %v981 = vunpack.c.h.b16 %v802
        %v982 = vunpack.c.l.b16 %v803
        %v983 = vunpack.c.h.b16 %v803
        %v984 = vunpack.c.l.b16 %v804
        %v985 = vunpack.c.h.b16 %v804
        %v986 = vunpack.c.l.b16 %v805
        %v987 = vunpack.c.h.b16 %v805
        %v988 = vunpack.c.l.b16 %v806
        %v989 = vunpack.c.h.b16 %v806
        %v990 = vunpack.c.l.b16 %v807
        %v991 = vunpack.c.h.b16 %v807
        %v992 = vunpack.c.l.b16 %v808
        %v993 = vunpack.c.h.b16 %v808
        %v994 = vunpack.c.l.b16 %v809
        %v995 = vunpack.c.h.b16 %v809
        %v996 = vunpack.c.l.b16 %v810
        %v997 = vunpack.c.h.b16 %v810
        %v998 = vunpack.c.l.b16 %v811
        %v999 = vunpack.c.h.b16 %v811
        %v1000 = vunpack.c.l.b16 %v812
        %v1001 = vunpack.c.h.b16 %v812
        %v1002 = vunpack.c.l.b16 %v813
        %v1003 = vunpack.c.h.b16 %v813
        %v1004 = vunpack.c.l.b16 %v814
        %v1005 = vunpack.c.h.b16 %v814
        %v1006 = vunpack.c.l.b16 %v815
        %v1007 = vunpack.c.h.b16 %v815
        %v1008 = vpack.c.b16 %v882, %v880
        %v1009 = vpack.c.b16 %v883, %v881
        %v1010 = vpack.c.b16 %v886, %v884
        %v1011 = vpack.c.b16 %v887, %v885
        %v1012 = vpack.c.b16 %v890, %v888
        %v1013 = vpack.c.b16 %v891, %v889
        %v1014 = vpack.c.b16 %v894, %v892
        %v1015 = vpack.c.b16 %v895, %v893
        %v1016 = vpack.c.b16 %v898, %v896
        %v1017 = vpack.c.b16 %v899, %v897
        %v1018 = vpack.c.b16 %v902, %v900
        %v1019 = vpack.c.b16 %v903, %v901
        %v1020 = vpack.c.b16 %v906, %v904
        %v1021 = vpack.c.b16 %v907, %v905
        %v1022 = vpack.c.b16 %v910, %v908
        %v1023 = vpack.c.b16 %v911, %v909
        %v1024 = vpack.c.b16 %v914, %v912
        %v1025 = vpack.c.b16 %v915, %v913
        %v1026 = vpack.c.b16 %v918, %v916
        %v1027 = vpack.c.b16 %v919, %v917
        %v1028 = vpack.c.b16 %v922, %v920
        %v1029 = vpack.c.b16 %v923, %v921
        %v1030 = vpack.c.b16 %v926, %v924
        %v1031 = vpack.c.b16 %v927, %v925
        %v1032 = vpack.c.b16 %v930, %v928
        %v1033 = vpack.c.b16 %v931, %v929
        %v1034 = vpack.c.b16 %v934, %v932
        %v1035 = vpack.c.b16 %v935, %v933
        %v1036 = vpack.c.b16 %v938, %v936
        %v1037 = vpack.c.b16 %v939, %v937
        %v1038 = vpack.c.b16 %v942, %v940
        %v1039 = vpack.c.b16 %v943, %v941
        %v1040 = vpack.c.b16 %v946, %v944
        %v1041 = vpack.c.b16 %v947, %v945
        %v1042 = vpack.c.b16 %v950, %v948
        %v1043 = vpack.c.b16 %v951, %v949
        %v1044 = vpack.c.b16 %v954, %v952
        %v1045 = vpack.c.b16 %v955, %v953
        %v1046 = vpack.c.b16 %v958, %v956
        %v1047 = vpack.c.b16 %v959, %v957
        %v1048 = vpack.c.b16 %v962, %v960
        %v1049 = vpack.c.b16 %v963, %v961
        %v1050 = vpack.c.b16 %v966, %v964
        %v1051 = vpack.c.b16 %v967, %v965
        %v1052 = vpack.c.b16 %v970, %v968
        %v1053 = vpack.c.b16 %v971, %v969
        %v1054 = vpack.c.b16 %v974, %v972
        %v1055 = vpack.c.b16 %v975, %v973
        %v1056 = vpack.c.b16 %v978, %v976
        %v1057 = vpack.c.b16 %v979, %v977
        %v1058 = vpack.c.b16 %v982, %v980
        %v1059 = vpack.c.b16 %v983, %v981
        %v1060 = vpack.c.b16 %v986, %v984
        %v1061 = vpack.c.b16 %v987, %v985
        %v1062 = vpack.c.b16 %v990, %v988
        %v1063 = vpack.c.b16 %v991, %v989
        %v1064 = vpack.c.b16 %v994, %v992
        %v1065 = vpack.c.b16 %v995, %v993
        %v1066 = vpack.c.b16 %v998, %v996
        %v1067 = vpack.c.b16 %v999, %v997
        %v1068 = vpack.c.b16 %v1002, %v1000
        %v1069 = vpack.c.b16 %v1003, %v1001
        %v1070 = vpack.c.b16 %v1006, %v1004
        %v1071 = vpack.c.b16 %v1007, %v1005
        %1136 = vmatprep.subr.bf16.mxu0 %v1009
        %1137 = vmatpush1.bf16.msra.mxu0 %v1008
        %1138 = vmatprep.subr.bf16.mxu0 %v1011
        %1139 = vmatpush1.bf16.msra.mxu0 %v1010
        %1140 = vmatprep.subr.bf16.mxu0 %v1013
        %1141 = vmatpush1.bf16.msra.mxu0 %v1012
        %1142 = vmatprep.subr.bf16.mxu0 %v1015
        %1143 = vmatpush1.bf16.msra.mxu0 %v1014
        %1144 = vmatprep.subr.bf16.mxu0 %v1017
        %1145 = vmatpush1.bf16.msra.mxu0 %v1016
        %1146 = vmatprep.subr.bf16.mxu0 %v1019
        %1147 = vmatpush1.bf16.msra.mxu0 %v1018
        %1148 = vmatprep.subr.bf16.mxu0 %v1021
        %1149 = vmatpush1.bf16.msra.mxu0 %v1020
        %1150 = vmatprep.subr.bf16.mxu0 %v1023
        %1151 = vmatpush1.bf16.msra.mxu0 %v1022
        %1152 = vmatprep.subr.bf16.mxu0 %v1025
        %1153 = vmatpush1.bf16.msra.mxu0 %v1024
        %1154 = vmatprep.subr.bf16.mxu0 %v1027
        %1155 = vmatpush1.bf16.msra.mxu0 %v1026
        %1156 = vmatprep.subr.bf16.mxu0 %v1029
        %1157 = vmatpush1.bf16.msra.mxu0 %v1028
        %1158 = vmatprep.subr.bf16.mxu0 %v1031
        %1159 = vmatpush1.bf16.msra.mxu0 %v1030
        %1160 = vmatprep.subr.bf16.mxu0 %v1033
        %1161 = vmatpush1.bf16.msra.mxu0 %v1032
        %1162 = vmatprep.subr.bf16.mxu0 %v1035
        %1163 = vmatpush1.bf16.msra.mxu0 %v1034
        %1164 = vmatprep.subr.bf16.mxu0 %v1037
        %1165 = vmatpush1.bf16.msra.mxu0 %v1036
        %1166 = vmatprep.subr.bf16.mxu0 %v1039
        %1167 = vmatpush1.bf16.msra.mxu0 %v1038
        %1168 = vmatprep.mubr.bf16.mxu0 %v719
        %1169 = vmatmul.mubr.bf16.gmra.mrb[0].mxu0 %v718
        %v1170 = vpop.f32.mrb[0].mxu0
        %v1171 = vadd.f32 0.0, %v1170
        %v1172 = vpop.f32.mrb[0].mxu0
        %v1173 = vadd.f32 0.0, %v1172
        %v1174 = vpop.f32.mrb[0].mxu0
        %v1175 = vpop.f32.mrb[0].mxu0
        %1176 = vdwg.mxu0
        %1177 = vmatprep.subr.bf16.mxu0 %v1041
        %1178 = vmatpush1.bf16.msra.mxu0 %v1040
        %1179 = vmatprep.subr.bf16.mxu0 %v1043
        %1180 = vmatpush1.bf16.msra.mxu0 %v1042
        %1181 = vmatprep.subr.bf16.mxu0 %v1045
        %1182 = vmatpush1.bf16.msra.mxu0 %v1044
        %1183 = vmatprep.subr.bf16.mxu0 %v1047
        %1184 = vmatpush1.bf16.msra.mxu0 %v1046
        %1185 = vmatprep.subr.bf16.mxu0 %v1049
        %1186 = vmatpush1.bf16.msra.mxu0 %v1048
        %1187 = vmatprep.subr.bf16.mxu0 %v1051
        %1188 = vmatpush1.bf16.msra.mxu0 %v1050
        %1189 = vmatprep.subr.bf16.mxu0 %v1053
        %1190 = vmatpush1.bf16.msra.mxu0 %v1052
        %1191 = vmatprep.subr.bf16.mxu0 %v1055
        %1192 = vmatpush1.bf16.msra.mxu0 %v1054
        %1193 = vmatprep.subr.bf16.mxu0 %v1057
        %1194 = vmatpush1.bf16.msra.mxu0 %v1056
        %1195 = vmatprep.subr.bf16.mxu0 %v1059
        %1196 = vmatpush1.bf16.msra.mxu0 %v1058
        %1197 = vmatprep.subr.bf16.mxu0 %v1061
        %1198 = vmatpush1.bf16.msra.mxu0 %v1060
        %1199 = vmatprep.subr.bf16.mxu0 %v1063
        %1200 = vmatpush1.bf16.msra.mxu0 %v1062
        %1201 = vmatprep.subr.bf16.mxu0 %v1065
        %1202 = vmatpush1.bf16.msra.mxu0 %v1064
        %1203 = vmatprep.subr.bf16.mxu0 %v1067
        %1204 = vmatpush1.bf16.msra.mxu0 %v1066
        %1205 = vmatprep.subr.bf16.mxu0 %v1069
        %1206 = vmatpush1.bf16.msra.mxu0 %v1068
        %1207 = vmatprep.subr.bf16.mxu0 %v1071
        %1208 = vmatpush1.bf16.msra.mxu0 %v1070
        %1209 = vmatprep.mubr.bf16.mxu0 %v721
        %1210 = vmatmul.mubr.bf16.gmra.mrb[0].mxu0 %v720
        %v1211 = vpop.f32.mrb[0].mxu0
        %v1212 = vadd.f32 %v1171, %v1211
        %v1213 = vpop.f32.mrb[0].mxu0
        %v1214 = vadd.f32 %v1173, %v1213
        %v1215 = vpop.f32.mrb[0].mxu0
        %v1216 = vpop.f32.mrb[0].mxu0
        %1217 = vdwg.mxu0
        %v1218 = vld [vmem:[%s408] sm:$0x1]
        %v1220 = vlaneseq
        %v1221 = vshrl.u32 %v1220, 7
        %v1222 = vsub.s32 0, %v1221
        %v1223 = vrot.slane %v1218, %v1222
        %v1225 = vadd.f32 %v1212, %v1223
        %1226 = vst [vmem:[%s415] sm:$0x3] %v1225
        %p1227 = scmp.eq.s32.totalorder %s29, 0
        // Predicated region
        $region45: #{resnet3modal_forward.3} parent=43 // pred_check
          %p1228 = pneg %p1227
        $region46: #{resnet3modal_forward.3} parent=43 // pred_check_branch
          %1230 = sbr.rel (%p1228) target = $region48
        $region47: #{resnet3modal_forward.3} parent=43 // pred_region
          %v1231 = vld [vmem:[%s5] sm:$0x1]
          %v1233 = vlaneseq
          %v1234 = vshrl.u32 %v1233, 7
          %v1235 = vsub.s32 0, %v1234
          %v1236 = vrot.slane %v1231, %v1235
          %v1238 = vadd.f32 %v1236, %v1214
          %1239 = vst [vmem:[#allocation4] sm:$0x3] %v1238
        $region48: #{resnet3modal_forward.3} parent=43 // pred_fallthru
          _
        %p1240 = scmp.gt.s32.totalorder %s29, 0
        // Predicated region
        $region49: #{resnet3modal_forward.3} parent=43 // pred_check
          %p1241 = pneg %p1240
        $region50: #{resnet3modal_forward.3} parent=43 // pred_check_branch
          %1243 = sbr.rel (%p1241) target = $region52
        $region51: #{resnet3modal_forward.3} parent=43 // pred_region
          %v1244 = vld [vmem:[#allocation4] sm:$0x3]
          %v1245 = vadd.f32 %v1244, %v1214
          %1246 = vst [vmem:[#allocation4] sm:$0x3] %v1245
        $region52: #{resnet3modal_forward.3} parent=43 // pred_fallthru
          _
        %s1247 = sand.u32 %s199, 1
        %s1248 = scalar_lea.sflag [#allocation3], %s1247
        %s1249 = sand.u32 %s199, 1
        %s1250 = smul.addr %s1249, 4
        %s1251 = scalar_lea.vmem [#allocation2], %s1250
        %p1252 = scmp.lt.s32.totalorder %s29, 2
        %s1253 = scalar_select %p1252, %s29, 2
        %p1254 = scmp.lt.s32.totalorder %s28, 0
        %s1255 = scalar_select %p1254, %s28, 0
        %s1256 = sadd.s32 %s1255, %s1253
        %s1257 = smul.addr %s1256, 2
        %s1258 = scalar_lea.vmem %s7, %s1257
        // Predicated region
        $region53: #{resnet3modal_forward.3} parent=43 // pred_check
          %p1259 = pneg %p209
        $region54: #{resnet3modal_forward.3} parent=43 // pred_check_branch
          %1261 = sbr.rel (%p1259) target = $region56
        $region55: #{resnet3modal_forward.3} parent=43 // pred_region
          %s1263 = ssub.s32 64, 64
          %1264 = vsyncadd %s1248, %s1263
          %s1265 = smul.addr %s28, 4
          %s1266 = smul.addr %s29, 4
          %s1267 = sadd.s32 %s1265, %s1266
          %s1268 = smul.addr %s1267, 16
          %s1269 = scalar_lea.hbm %s6, %s1268
          %s1271 = sshll.u32 %s1251, 4
          %s1272 = int_to_ptr.vmem [resolvable:$true] %s1271
          %1274 = dma.vmem_to_hbm [thread:$0]  %s1272, 64, %s1269, %s1248
        $region56: #{resnet3modal_forward.3} parent=43 // pred_fallthru
          _
        // Predicated region
        $region57: #{resnet3modal_forward.3} parent=43 // pred_check
          %p1275 = pneg %p237
        $region58: #{resnet3modal_forward.3} parent=43 // pred_check_branch
          %1277 = sbr.rel (%p1275) target = $region60
        $region59: #{resnet3modal_forward.3} parent=43 // pred_region
          _
        $region60: #{resnet3modal_forward.3} parent=43 // pred_fallthru
          _
        // Predicated region
        $region61: #{resnet3modal_forward.3} parent=43 // pred_check
          %p1278 = pneg %p263
        $region62: #{resnet3modal_forward.3} parent=43 // pred_check_branch
          %1280 = sbr.rel (%p1278) target = $region64
        $region63: #{resnet3modal_forward.3} parent=43 // pred_region
          %s1282 = ssub.s32 32, 32
          %1283 = vsyncadd [#allocation5], %s1282
          %s1284 = smul.addr %s28, 32
          %s1285 = scalar_lea.hbm %s8, %s1284
          %s1287 = sshll.u32 [#allocation4], 4
          %s1288 = int_to_ptr.vmem [resolvable:$true] %s1287
          %1290 = dma.vmem_to_hbm [thread:$0]  %s1288, 32, %s1285, [#allocation5]
        $region64: #{resnet3modal_forward.3} parent=43 // pred_fallthru
          _
        // Predicated region
        $region65: #{resnet3modal_forward.3} parent=43 // pred_check
          %p1291 = pneg %p263
        $region66: #{resnet3modal_forward.3} parent=43 // pred_check_branch
          %1293 = sbr.rel (%p1291) target = $region68
        $region67: #{resnet3modal_forward.3} parent=43 // pred_region
          %1294 = dma.done [#allocation5], 32
        $region68: #{resnet3modal_forward.3} parent=43 // pred_fallthru
          _
      $region44: #{resnet3modal_forward.3} parent=5 // pred_fallthru
        _
      %p1295 = scmp.le.s32.totalorder 2, %s19
      // Predicated region
      $region69: #{resnet3modal_forward.3} parent=5 // pred_check
        %p1296 = pneg %p1295
      $region70: #{resnet3modal_forward.3} parent=5 // pred_check_branch
        %1298 = sbr.rel (%p1296) target = $region72
      $region71: #{resnet3modal_forward.3} parent=5 // pred_region
        %s1299 = ssub.s32 %s19, 2
        // Predicated region
        $region73: #{resnet3modal_forward.3} parent=71 // pred_check
          %p1300 = pneg %p215
        $region74: #{resnet3modal_forward.3} parent=71 // pred_check_branch
          %1302 = sbr.rel (%p1300) target = $region76
        $region75: #{resnet3modal_forward.3} parent=71 // pred_region
          %s1303 = sand.u32 %s200, 1
          %s1304 = scalar_lea.sflag [#allocation3], %s1303
          %s1305 = sand.u32 %s200, 1
          %s1306 = smul.addr %s1305, 4
          %s1307 = scalar_lea.vmem [#allocation2], %s1306
          %1308 = dma.done %s1304, 64
        $region76: #{resnet3modal_forward.3} parent=71 // pred_fallthru
          _
        // Predicated region
        $region77: #{resnet3modal_forward.3} parent=71 // pred_check
          %p1309 = pneg %p243
        $region78: #{resnet3modal_forward.3} parent=71 // pred_check_branch
          %1311 = sbr.rel (%p1309) target = $region80
        $region79: #{resnet3modal_forward.3} parent=71 // pred_region
          %p1312 = scmp.lt.s32.totalorder %s31, 2
          %s1313 = scalar_select %p1312, %s31, 2
          %p1314 = scmp.lt.s32.totalorder %s30, 0
          %s1315 = scalar_select %p1314, %s30, 0
          %s1316 = sadd.s32 %s1315, %s1313
          %s1317 = smul.addr %s1316, 2
          %s1318 = scalar_lea.vmem %s7, %s1317
        $region80: #{resnet3modal_forward.3} parent=71 // pred_fallthru
          _
      $region72: #{resnet3modal_forward.3} parent=5 // pred_fallthru
        _
    $region6: #{resnet3modal_forward.3} parent=1 // loop_footer
      %s23 = sadd.s32 1, %s19
    $region7: #{resnet3modal_forward.3} parent=1 // loop_footer_branch
      %18 = sbr.rel target = $region3
    $region8: #{resnet3modal_forward.3} parent=1 // loop_exit
      _
    %1319 = vsyncpa [#allocation3], 1
    %s1320 = scalar_lea.sflag [#allocation3], 1
    %1321 = vsyncpa %s1320, 1
    %1322 = vsyncpa [#allocation5], 1

</llo_original>
